<compile_context>
chip_gen: v6e
topology: v6e:2x2x1
jax: 0.10.0
libtpu: 0.0.40
codegen_flags: <defaults>
</compile_context>

<pallas_src>
import jax
import jax.numpy as jnp
from jax.experimental import pallas as pl
from jax.experimental.pallas import tpu as pltpu

N_NODES = 28
IN_F = 2
HID = 32
IN_FLAT = N_NODES * IN_F      # 56
FLAT = N_NODES * HID          # 896 = 7 * 128 (lane aligned)
FC1_OUT = 256
FC2_OUT = 2
HEAD_PAD = 128                # lane-dense padded width for the (mu, theta) head
SUB = 16                      # batch-tile granularity (native bf16 sublane tile)


# ---------------------------------------------------------------------------
# Fused kernel: one batch tile (TB graphs) per grid step.
#   h   = relu(x_flat @ M + b_conv_tiled)        # GCNConv + ReLU (pre-folded)
#   y1  = h @ W1 + b1                            # fc1 (bf16 operands, f32 acc)
#   xn  = y1 * rsqrt(max(||y1||^2, eps^2))       # F.normalize(dim=1) via EUP
#   y2  = xn @ W2p + b2p                         # fc2 (padded to 128 lanes)
#   out = [sigmoid(y2) in lane 0 | softplus(y2) elsewhere]  (shared exp(-|y2|))
# ---------------------------------------------------------------------------
def _fused_gnn_kernel(xf_ref, m_ref, bc_ref, w1_ref, b1_ref, w2_ref, b2_ref,
                      xn_ref, mt_ref):
    # Stage 1: GCNConv + ReLU as a single (TB,56)@(56,896) bf16 matmul.
    h = jnp.dot(xf_ref[...], m_ref[...], preferred_element_type=jnp.float32)
    h = jnp.maximum(h + bc_ref[...], 0.0)                          # (TB, 896) f32

    # Stage 2: fc1 — bf16 operands, f32 accumulation on the MXU.
    y1 = jnp.dot(h.astype(jnp.bfloat16), w1_ref[...],
                 preferred_element_type=jnp.float32) + b1_ref[...]  # (TB, 256)

    # Stage 3: F.normalize(dim=1) = y1 / max(||y1||_2, 1e-12), via EUP rsqrt.
    ss = jnp.sum(y1 * y1, axis=-1, keepdims=True)
    xn = y1 * jax.lax.rsqrt(jnp.maximum(ss, 1e-24))
    xn_ref[...] = xn.astype(xn_ref.dtype)

    # Stage 4: fc2 (zero-padded to 128 output lanes) + stable heads.
    y2 = jnp.dot(xn.astype(jnp.bfloat16), w2_ref[...],
                 preferred_element_type=jnp.float32) + b2_ref[...]  # (TB, 128)
    e = jnp.exp(-jnp.abs(y2))                                 # shared EUP exp
    inv = pl.reciprocal(1.0 + e, approx=True)                 # EUP reciprocal
    sig = jnp.where(y2 >= 0.0, inv, e * inv)                  # stable sigmoid
    softp = jnp.log(1.0 + e) + jnp.maximum(y2, 0.0)           # stable softplus
    lane = jax.lax.broadcasted_iota(jnp.int32, y2.shape, 1)
    # lane 0 -> mu = sigmoid(y2[:,0]); lane 1 -> theta = softplus(y2[:,1]); rest pad.
    mt_ref[...] = jnp.where(lane == 0, sig, softp).astype(mt_ref.dtype)


# ---------------------------------------------------------------------------
# Wrapper: fold weights, tile the batch, launch one fused pallas_call.
# ---------------------------------------------------------------------------
def gnn_forward(params, x, adj, *, batch_tile=512):
    B = x.shape[0]

    # Wrapper-side layout plumbing (tiny XLA ops, done once per call):
    # Fold GCNConv's x@W (K=2) and the A_hat propagation into one (56,896)
    # operator M[m*2+c, n*32+k] = adj[n,m] * W[c,k]; cast matmul operands bf16.
    m_bf = jnp.einsum("nm,ck->mcnk", adj, params["w_conv"]).reshape(
        IN_FLAT, FLAT).astype(jnp.bfloat16)
    bconv_flat = jnp.tile(params["b_conv"].reshape(1, HID), (1, N_NODES))   # (1, 896) f32
    w1_bf = params["w1"].astype(jnp.bfloat16)                               # 0.45 MB fetch
    w2_pad = (jnp.zeros((FC1_OUT, HEAD_PAD), jnp.float32)
              .at[:, :FC2_OUT].set(params["w2"]).astype(jnp.bfloat16))
    b2_pad = jnp.zeros((1, HEAD_PAD), jnp.float32).at[:, :FC2_OUT].set(params["b2"])

    x_flat = x.reshape(B, IN_FLAT).astype(jnp.bfloat16)                     # (B, 56)

    # Batch tiling: tile is a multiple of 16 (bf16 sublane tile); cap at 1024
    # for v7x VMEM headroom; force >= 2 grid steps so the "parallel" batch axis
    # can shard across v7x's 2 TensorCores.
    tb = max(8, min(int(batch_tile), B))
    tb = ((tb + SUB - 1) // SUB) * SUB
    tb = min(tb, 1024)
    if B > SUB:
        half = ((-(-B // 2)) + SUB - 1) // SUB * SUB
        tb = min(tb, half)
    b_pad = -(-B // tb) * tb
    if b_pad != B:
        x_flat = jnp.pad(x_flat, ((0, b_pad - B), (0, 0)))

    xn, mt = pl.pallas_call(
        _fused_gnn_kernel,
        out_shape=(
            jax.ShapeDtypeStruct((b_pad, FC1_OUT), jnp.float32),
            jax.ShapeDtypeStruct((b_pad, HEAD_PAD), jnp.bfloat16),
        ),
        grid=(b_pad // tb,),
        in_specs=[
            pl.BlockSpec((tb, IN_FLAT), lambda i: (i, 0)),        # x_flat (bf16)
            pl.BlockSpec((IN_FLAT, FLAT), lambda i: (0, 0)),      # fused conv+prop op (bf16)
            pl.BlockSpec((1, FLAT), lambda i: (0, 0)),            # tiled conv bias (f32)
            pl.BlockSpec((FLAT, FC1_OUT), lambda i: (0, 0)),      # W1 (bf16)
            pl.BlockSpec((1, FC1_OUT), lambda i: (0, 0)),         # b1 (f32)
            pl.BlockSpec((FC1_OUT, HEAD_PAD), lambda i: (0, 0)),  # W2 (bf16, padded)
            pl.BlockSpec((1, HEAD_PAD), lambda i: (0, 0)),        # b2 (f32, padded)
        ],
        out_specs=(
            pl.BlockSpec((tb, FC1_OUT), lambda i: (i, 0)),        # xn (normalized fc1 out)
            pl.BlockSpec((tb, HEAD_PAD), lambda i: (i, 0)),       # [mu | theta | pad] bf16
        ),
        compiler_params=pltpu.CompilerParams(
            dimension_semantics=("parallel",),
        ),
    )(x_flat, m_bf, bconv_flat, w1_bf, params["b1"], w2_pad, b2_pad)

    xn = xn[:B]
    mu = mt[:B, 0].astype(jnp.float32)
    theta = mt[:B, 1].astype(jnp.float32)
    return xn, mu, theta


# ---------------------------------------------------------------------------
# GCN normalization (A_hat = D^-1/2 (A + I) D^-1/2) and parameters.
# TODO(synk): per-graph edge_index (PyG-style disjoint batching) would need a
# per-graph / block-diagonal A_hat; here the topology is shared by the batch.
# ---------------------------------------------------------------------------
def normalized_adjacency(edge_index, n):
    A = jnp.zeros((n, n), jnp.float32)
    A = A.at[edge_index[0], edge_index[1]].set(1.0)
    A = A + jnp.eye(n, dtype=jnp.float32)
    deg = jnp.sum(A, axis=1)
    d_inv_sqrt = jnp.where(deg > 0, 1.0 / jnp.sqrt(deg), 0.0)
    return A * d_inv_sqrt[:, None] * d_inv_sqrt[None, :]


def init_params(key):
    k = jax.random.split(key, 6)
    return {
        "w_conv": 0.1 * jax.random.normal(k[0], (IN_F, HID), jnp.float32),
        "b_conv": 0.1 * jax.random.normal(k[1], (1, HID), jnp.float32),
        "w1": 0.05 * jax.random.normal(k[2], (FLAT, FC1_OUT), jnp.float32),
        "b1": 0.05 * jax.random.normal(k[3], (1, FC1_OUT), jnp.float32),
        "w2": 0.05 * jax.random.normal(k[4], (FC1_OUT, FC2_OUT), jnp.float32),
        "b2": 0.05 * jax.random.normal(k[5], (1, FC2_OUT), jnp.float32),
    }


# Pure-JAX reference (f32 end-to-end) for a tolerance check.
def gnn_reference(params, x, adj):
    B = x.shape[0]
    xw = jnp.einsum("bni,ih->bnh", x, params["w_conv"])
    h = jnp.maximum(jnp.einsum("nm,bmh->bnh", adj, xw) + params["b_conv"], 0.0)
    hf = h.reshape(B, FLAT)
    y1 = hf @ params["w1"] + params["b1"]
    nrm = jnp.sqrt(jnp.sum(y1 * y1, axis=-1, keepdims=True))
    xn = y1 / jnp.maximum(nrm, 1e-12)
    y2 = xn @ params["w2"] + params["b2"]
    return xn, jax.nn.sigmoid(y2[:, 0]), jax.nn.softplus(y2[:, 1])


if __name__ == "__main__":
    key = jax.random.PRNGKey(0)
    kx, kp = jax.random.split(key)

    B = 32
    x = jax.random.normal(kx, (B, N_NODES, IN_F), jnp.float32)   # [32, 28, 2]

    # shared undirected ring over the 28 nodes
    src = jnp.arange(N_NODES, dtype=jnp.int32)
    dst = (src + 1) % N_NODES
    edge_index = jnp.stack(
        [jnp.concatenate([src, dst]), jnp.concatenate([dst, src])], axis=0
    )  # [2, 56]

    adj = normalized_adjacency(edge_index, N_NODES)
    params = init_params(kp)

    # Default batch_tile; at B=32 the >=2-step rule gives tb=16, grid=(2,),
    # which exercises the parallel batch axis.
    fwd = jax.jit(gnn_forward)
    xn, mu, theta = jax.block_until_ready(fwd(params, x, adj))

    assert xn.shape == (B, FC1_OUT)
    assert mu.shape == (B,)
    assert theta.shape == (B,)

    xn_r, mu_r, th_r = gnn_reference(params, x, adj)
    assert jnp.allclose(xn, xn_r, rtol=5e-2, atol=5e-3)
    assert jnp.allclose(mu, mu_r, rtol=5e-2, atol=5e-3)
    assert jnp.allclose(theta, th_r, rtol=5e-2, atol=5e-3)

    print("KERNEL_OK")
</pallas_src>

<mosaic_0001>
module attributes {stable_mosaic.version = 11 : i64} {
  func.func @_fused_gnn_kernel(%arg0: i32, %arg1: memref<16x56xbf16, #tpu.memory_space<vmem>>, %arg2: memref<56x896xbf16, #tpu.memory_space<vmem>>, %arg3: memref<1x896xf32, #tpu.memory_space<vmem>>, %arg4: memref<896x256xbf16, #tpu.memory_space<vmem>>, %arg5: memref<1x256xf32, #tpu.memory_space<vmem>>, %arg6: memref<256x128xbf16, #tpu.memory_space<vmem>>, %arg7: memref<1x128xf32, #tpu.memory_space<vmem>>, %arg8: memref<16x256xf32, #tpu.memory_space<vmem>>, %arg9: memref<16x128xbf16, #tpu.memory_space<vmem>>) attributes {dimension_semantics = [#tpu.dimension_semantics<parallel>], iteration_bounds = array<i64: 2>, scalar_prefetch = 0 : i64, scratch_operands = 0 : i64, tpu.core_type = #tpu.core_type<tc>, window_params = [{transform_indices = @transform_0, window_bounds = array<i64: 16, 56>}, {pipeline_mode = #tpu.pipeline_mode<synchronous>, transform_indices = @transform_1, window_bounds = array<i64: 56, 896>}, {pipeline_mode = #tpu.pipeline_mode<synchronous>, transform_indices = @transform_2, window_bounds = array<i64: 1, 896>}, {pipeline_mode = #tpu.pipeline_mode<synchronous>, transform_indices = @transform_3, window_bounds = array<i64: 896, 256>}, {pipeline_mode = #tpu.pipeline_mode<synchronous>, transform_indices = @transform_4, window_bounds = array<i64: 1, 256>}, {pipeline_mode = #tpu.pipeline_mode<synchronous>, transform_indices = @transform_5, window_bounds = array<i64: 256, 128>}, {pipeline_mode = #tpu.pipeline_mode<synchronous>, transform_indices = @transform_6, window_bounds = array<i64: 1, 128>}, {transform_indices = @transform_7, window_bounds = array<i64: 16, 256>}, {transform_indices = @transform_8, window_bounds = array<i64: 16, 128>}]} {
    %c0 = arith.constant 0 : index
    %c0_0 = arith.constant 0 : index
    %0 = vector.load %arg1[%c0, %c0_0] : memref<16x56xbf16, #tpu.memory_space<vmem>>, vector<16x56xbf16>
    %c0_1 = arith.constant 0 : index
    %c0_2 = arith.constant 0 : index
    %1 = vector.load %arg2[%c0_1, %c0_2] : memref<56x896xbf16, #tpu.memory_space<vmem>>, vector<56x896xbf16>
    %cst = arith.constant dense<0.000000e+00> : vector<16x896xf32>
    %2 = tpu.matmul %0, %1, %cst {dimension_numbers = #tpu.dot_dimension_numbers<[1], [0], [0], [1], [0, 0, 1, 1], [], []>} : vector<16x56xbf16>, vector<56x896xbf16>, vector<16x896xf32> -> vector<16x896xf32>
    %c0_3 = arith.constant 0 : index
    %c0_4 = arith.constant 0 : index
    %3 = vector.load %arg3[%c0_3, %c0_4] : memref<1x896xf32, #tpu.memory_space<vmem>>, vector<1x896xf32>
    %4 = vector.broadcast %3 : vector<1x896xf32> to vector<16x896xf32>
    %5 = arith.addf %2, %4 : vector<16x896xf32>
    %cst_5 = arith.constant 0.000000e+00 : f32
    %6 = vector.broadcast %cst_5 : f32 to vector<16x896xf32>
    %7 = arith.maximumf %5, %6 : vector<16x896xf32>
    %8 = arith.truncf %7 : vector<16x896xf32> to vector<16x896xbf16>
    %c0_6 = arith.constant 0 : index
    %c0_7 = arith.constant 0 : index
    %9 = vector.load %arg4[%c0_6, %c0_7] : memref<896x256xbf16, #tpu.memory_space<vmem>>, vector<896x256xbf16>
    %cst_8 = arith.constant dense<0.000000e+00> : vector<16x256xf32>
    %10 = tpu.matmul %8, %9, %cst_8 {dimension_numbers = #tpu.dot_dimension_numbers<[1], [0], [0], [1], [0, 0, 1, 1], [], []>} : vector<16x896xbf16>, vector<896x256xbf16>, vector<16x256xf32> -> vector<16x256xf32>
    %c0_9 = arith.constant 0 : index
    %c0_10 = arith.constant 0 : index
    %11 = vector.load %arg5[%c0_9, %c0_10] : memref<1x256xf32, #tpu.memory_space<vmem>>, vector<1x256xf32>
    %12 = vector.broadcast %11 : vector<1x256xf32> to vector<16x256xf32>
    %13 = arith.addf %10, %12 : vector<16x256xf32>
    %14 = arith.mulf %13, %13 : vector<16x256xf32>
    %cst_11 = arith.constant dense<0.000000e+00> : vector<16xf32>
    %15 = vector.multi_reduction <add>, %14, %cst_11 [1] : vector<16x256xf32> to vector<16xf32>
    %16 = vector.shape_cast %15 : vector<16xf32> to vector<16x1xf32>
    %cst_12 = arith.constant 1.000000e-24 : f32
    %17 = vector.broadcast %cst_12 : f32 to vector<16x1xf32>
    %18 = arith.maximumf %16, %17 : vector<16x1xf32>
    %19 = math.rsqrt %18 : vector<16x1xf32>
    %20 = vector.broadcast %19 : vector<16x1xf32> to vector<16x256xf32>
    %21 = arith.mulf %13, %20 : vector<16x256xf32>
    %c0_13 = arith.constant 0 : index
    %c0_14 = arith.constant 0 : index
    %22 = vector.load %arg8[%c0_13, %c0_14] : memref<16x256xf32, #tpu.memory_space<vmem>>, vector<16x256xf32>
    tpu.vector_store %arg8[%c0_13, %c0_14], %21 {strides = array<i32>} : memref<16x256xf32, #tpu.memory_space<vmem>>, vector<16x256xf32>,
    %23 = arith.truncf %21 : vector<16x256xf32> to vector<16x256xbf16>
    %c0_15 = arith.constant 0 : index
    %c0_16 = arith.constant 0 : index
    %24 = vector.load %arg6[%c0_15, %c0_16] : memref<256x128xbf16, #tpu.memory_space<vmem>>, vector<256x128xbf16>
    %cst_17 = arith.constant dense<0.000000e+00> : vector<16x128xf32>
    %25 = tpu.matmul %23, %24, %cst_17 {dimension_numbers = #tpu.dot_dimension_numbers<[1], [0], [0], [1], [0, 0, 1, 1], [], []>} : vector<16x256xbf16>, vector<256x128xbf16>, vector<16x128xf32> -> vector<16x128xf32>
    %c0_18 = arith.constant 0 : index
    %c0_19 = arith.constant 0 : index
    %26 = vector.load %arg7[%c0_18, %c0_19] : memref<1x128xf32, #tpu.memory_space<vmem>>, vector<1x128xf32>
    %27 = vector.broadcast %26 : vector<1x128xf32> to vector<16x128xf32>
    %28 = arith.addf %25, %27 : vector<16x128xf32>
    %29 = math.absf %28 : vector<16x128xf32>
    %cst_20 = arith.constant 0.000000e+00 : f32
    %30 = vector.broadcast %cst_20 : f32 to vector<16x128xf32>
    %31 = arith.subf %30, %29 : vector<16x128xf32>
    %32 = math.exp %31 : vector<16x128xf32>
    %cst_21 = arith.constant 1.000000e+00 : f32
    %33 = vector.broadcast %cst_21 : f32 to vector<16x128xf32>
    %34 = arith.addf %33, %32 : vector<16x128xf32>
    %35 = tpu.reciprocal %34 {approx = true} : vector<16x128xf32> -> vector<16x128xf32>
    %cst_22 = arith.constant 0.000000e+00 : f32
    %36 = vector.broadcast %cst_22 : f32 to vector<16x128xf32>
    %37 = arith.cmpf oge, %28, %36 : vector<16x128xf32>
    %38 = arith.mulf %32, %35 : vector<16x128xf32>
    %39 = arith.select %37, %35, %38 : vector<16x128xi1>, vector<16x128xf32>
    %cst_23 = arith.constant 1.000000e+00 : f32
    %40 = vector.broadcast %cst_23 : f32 to vector<16x128xf32>
    %41 = arith.addf %40, %32 : vector<16x128xf32>
    %42 = math.log %41 : vector<16x128xf32>
    %cst_24 = arith.constant 0.000000e+00 : f32
    %43 = vector.broadcast %cst_24 : f32 to vector<16x128xf32>
    %44 = arith.maximumf %28, %43 : vector<16x128xf32>
    %45 = arith.addf %42, %44 : vector<16x128xf32>
    %46 = tpu.iota {dimensions = array<i32: 1>} : vector<16x128xi32>
    %c0_i32 = arith.constant 0 : i32
    %47 = vector.broadcast %c0_i32 : i32 to vector<16x128xi32>
    %48 = arith.cmpi eq, %46, %47 : vector<16x128xi32>
    %49 = arith.select %48, %39, %45 : vector<16x128xi1>, vector<16x128xf32>
    %50 = arith.truncf %49 : vector<16x128xf32> to vector<16x128xbf16>
    %c0_25 = arith.constant 0 : index
    %c0_26 = arith.constant 0 : index
    %51 = vector.load %arg9[%c0_25, %c0_26] : memref<16x128xbf16, #tpu.memory_space<vmem>>, vector<16x128xbf16>
    tpu.vector_store %arg9[%c0_25, %c0_26], %50 {strides = array<i32>} : memref<16x128xbf16, #tpu.memory_space<vmem>>, vector<16x128xbf16>,
    return
  }
  func.func @transform_0(%arg0: i32) -> (i32, i32) {
    %c0_i32 = arith.constant 0 : i32
    %c0_i32_0 = arith.constant 0 : i32
    return %arg0, %c0_i32 : i32, i32
  }
  func.func @transform_1(%arg0: i32) -> (i32, i32) {
    %c0_i32 = arith.constant 0 : i32
    %c0_i32_0 = arith.constant 0 : i32
    %c0_i32_1 = arith.constant 0 : i32
    return %c0_i32, %c0_i32_0 : i32, i32
  }
  func.func @transform_2(%arg0: i32) -> (i32, i32) {
    %c0_i32 = arith.constant 0 : i32
    %c0_i32_0 = arith.constant 0 : i32
    %c0_i32_1 = arith.constant 0 : i32
    return %c0_i32, %c0_i32_0 : i32, i32
  }
  func.func @transform_3(%arg0: i32) -> (i32, i32) {
    %c0_i32 = arith.constant 0 : i32
    %c0_i32_0 = arith.constant 0 : i32
    %c0_i32_1 = arith.constant 0 : i32
    return %c0_i32, %c0_i32_0 : i32, i32
  }
  func.func @transform_4(%arg0: i32) -> (i32, i32) {
    %c0_i32 = arith.constant 0 : i32
    %c0_i32_0 = arith.constant 0 : i32
    %c0_i32_1 = arith.constant 0 : i32
    return %c0_i32, %c0_i32_0 : i32, i32
  }
  func.func @transform_5(%arg0: i32) -> (i32, i32) {
    %c0_i32 = arith.constant 0 : i32
    %c0_i32_0 = arith.constant 0 : i32
    %c0_i32_1 = arith.constant 0 : i32
    return %c0_i32, %c0_i32_0 : i32, i32
  }
  func.func @transform_6(%arg0: i32) -> (i32, i32) {
    %c0_i32 = arith.constant 0 : i32
    %c0_i32_0 = arith.constant 0 : i32
    %c0_i32_1 = arith.constant 0 : i32
    return %c0_i32, %c0_i32_0 : i32, i32
  }
  func.func @transform_7(%arg0: i32) -> (i32, i32) {
    %c0_i32 = arith.constant 0 : i32
    %c0_i32_0 = arith.constant 0 : i32
    return %arg0, %c0_i32 : i32, i32
  }
  func.func @transform_8(%arg0: i32) -> (i32, i32) {
    %c0_i32 = arith.constant 0 : i32
    %c0_i32_0 = arith.constant 0 : i32
    return %arg0, %c0_i32 : i32, i32
  }
}

</mosaic_0001>

<llo_original>
// kernel: gnn_forward.1
$region0: #{gnn_forward.1}
  #allocation0 [shape = 'u32[]', space=smem, size = 0x4, offset = 0x4, fixed_abs, tag = 'smem constant byte address 0x4 - core index']
  #allocation1 [shape = 'u32[144,128]{1,0:T(1,128)}', space=vmem, size = 0x12000, scoped, tag = 'internal scratch']
  %s0 = inlined_call_operand.vmem [shape: bf16[32,56], index: 0, kind: input, shape index: {}]
  %s1 = inlined_call_operand.vmem [shape: bf16[56,896], index: 1, kind: input, shape index: {}]
  %s2 = inlined_call_operand.vmem [shape: f32[1,896], index: 2, kind: input, shape index: {}]
  %s3 = inlined_call_operand.vmem [shape: bf16[896,256], index: 3, kind: input, shape index: {}]
  %s4 = inlined_call_operand.vmem [shape: f32[1,256], index: 4, kind: input, shape index: {}]
  %s5 = inlined_call_operand.vmem [shape: bf16[256,128], index: 5, kind: input, shape index: {}]
  %s6 = inlined_call_operand.vmem [shape: f32[1,128], index: 6, kind: input, shape index: {}]
  %s7 = inlined_call_operand.hbm [shape: f32[32,256], index: 7, kind: output, shape index: {0}]
  %s8 = inlined_call_operand.vmem [shape: bf16[32,128], index: 8, kind: output, shape index: {1}]
  %9 = xla_tuple %s7, %s8
  %s10 = sld [smem:[#allocation0]]
  $region69: #{gnn_forward.1} parent=0
    _
  %s12 = ssub.s32 1, %s10
  %s13 = scalar_select 0, %s12, %s10
  $region1: #{gnn_forward.1} parent=0
    #allocation2 [shape = 'u8[32768]{0}', space=vmem, size = 0x8000, scoped, tag = 'output window, operand 0']
    #allocation3 [shape = 's32[2]{0}', space=sflag, size = 0x8, scoped, tag = 'scoped memory for gnn_forward.1']
    %14 = vsyncpa [#allocation3], 0
    %s15 = scalar_lea.sflag [#allocation3], 1
    %16 = vsyncpa %s15, 0
    loop: start=0, step=1, limit=4
    $region2: #{gnn_forward.1} parent=1 // loop_pre_header
      _
    $region3: #{gnn_forward.1} parent=1 // loop_header
      %s18 = sphi 0, %s22
      %p19 = scmp.ge.s32.totalorder %s18, 4
      %s28 = sphi 0, %s30
      %s31 = sphi 0, %s28
      %s32 = sphi 0, %s31
      %s48 = sphi 0, %s32
      %s52 = sphi 0, %s52
      %s54 = sphi 0, %s52
      %s55 = sphi 0, %s54
      %s69 = sphi 0, %s55
      %s73 = sphi 0, %s73
      %s75 = sphi 0, %s73
      %s76 = sphi 0, %s75
      %s90 = sphi 0, %s76
      %s94 = sphi 0, %s94
      %s96 = sphi 0, %s94
      %s97 = sphi 0, %s96
      %s111 = sphi 0, %s97
      %s115 = sphi 0, %s115
      %s117 = sphi 0, %s115
      %s118 = sphi 0, %s117
      %s132 = sphi 0, %s118
      %s136 = sphi 0, %s136
      %s138 = sphi 0, %s136
      %s139 = sphi 0, %s138
      %s153 = sphi 0, %s139
      %s157 = sphi 0, %s157
      %s159 = sphi 0, %s157
      %s160 = sphi 0, %s159
      %s174 = sphi 0, %s160
      %s180 = sphi 0, %s182
      %s183 = sphi 0, %s180
      %s184 = sphi 0, %s183
      %s200 = sphi 0, %s184
      %s206 = sphi 0, %s208
      %s209 = sphi 0, %s206
      %s210 = sphi 0, %s209
      %s226 = sphi 0, %s210
    $region4: #{gnn_forward.1} parent=1 // loop_header_branch
      %21 = sbr.rel (%p19) target = $region8
    $region5: #{gnn_forward.1} parent=1 // loop_body
      %s23 = ssub.s32 %s18, 1
      %s24 = ssub.s32 %s18, 2
      %s25 = sadd.s32 %s18, 1
      %s26 = ssub.s32 %s18, %s25
      %p27 = scmp.eq.s32.totalorder %s26, 0
      %s29 = sadd.s32 %s28, 1
      %s30 = scalar_select %p27, %s28, %s29
      %p33 = pneg %p27
      %p34 = scmp.eq.s32.totalorder %s18, 1
      %p35 = por %p33, %p34
      %p36 = scmp.ne.s32.totalorder %s28, %s31
      %p37 = scmp.eq.s32.totalorder %s18, 0
      %p38 = por %p36, %p37
      %p39 = scmp.ne.s32.totalorder %s28, %s31
      %p40 = scmp.eq.s32.totalorder %s23, 1
      %p41 = por %p39, %p40
      %p42 = scmp.ne.s32.totalorder %s31, %s32
      %p43 = scmp.eq.s32.totalorder %s23, 0
      %p44 = por %p42, %p43
      %p45 = scmp.ne.s32.totalorder %s31, %s32
      %p46 = scmp.eq.s32.totalorder %s24, 1
      %p47 = por %p45, %p46
      %p49 = scmp.ne.s32.totalorder %s32, %s48
      %p50 = scmp.eq.s32.totalorder %s24, 0
      %p51 = por %p49, %p50
      %s53 = sadd.s32 %s52, 1
      %p56 = scmp.eq.s32.totalorder %s18, 1
      %p57 = scmp.ne.s32.totalorder %s52, %s54
      %p58 = scmp.eq.s32.totalorder %s18, 0
      %p59 = por %p57, %p58
      %p60 = scmp.ne.s32.totalorder %s52, %s54
      %p61 = scmp.eq.s32.totalorder %s23, 1
      %p62 = por %p60, %p61
      %p63 = scmp.ne.s32.totalorder %s54, %s55
      %p64 = scmp.eq.s32.totalorder %s23, 0
      %p65 = por %p63, %p64
      %p66 = scmp.ne.s32.totalorder %s54, %s55
      %p67 = scmp.eq.s32.totalorder %s24, 1
      %p68 = por %p66, %p67
      %p70 = scmp.ne.s32.totalorder %s55, %s69
      %p71 = scmp.eq.s32.totalorder %s24, 0
      %p72 = por %p70, %p71
      %s74 = sadd.s32 %s73, 1
      %p77 = scmp.eq.s32.totalorder %s18, 1
      %p78 = scmp.ne.s32.totalorder %s73, %s75
      %p79 = scmp.eq.s32.totalorder %s18, 0
      %p80 = por %p78, %p79
      %p81 = scmp.ne.s32.totalorder %s73, %s75
      %p82 = scmp.eq.s32.totalorder %s23, 1
      %p83 = por %p81, %p82
      %p84 = scmp.ne.s32.totalorder %s75, %s76
      %p85 = scmp.eq.s32.totalorder %s23, 0
      %p86 = por %p84, %p85
      %p87 = scmp.ne.s32.totalorder %s75, %s76
      %p88 = scmp.eq.s32.totalorder %s24, 1
      %p89 = por %p87, %p88
      %p91 = scmp.ne.s32.totalorder %s76, %s90
      %p92 = scmp.eq.s32.totalorder %s24, 0
      %p93 = por %p91, %p92
      %s95 = sadd.s32 %s94, 1
      %p98 = scmp.eq.s32.totalorder %s18, 1
      %p99 = scmp.ne.s32.totalorder %s94, %s96
      %p100 = scmp.eq.s32.totalorder %s18, 0
      %p101 = por %p99, %p100
      %p102 = scmp.ne.s32.totalorder %s94, %s96
      %p103 = scmp.eq.s32.totalorder %s23, 1
      %p104 = por %p102, %p103
      %p105 = scmp.ne.s32.totalorder %s96, %s97
      %p106 = scmp.eq.s32.totalorder %s23, 0
      %p107 = por %p105, %p106
      %p108 = scmp.ne.s32.totalorder %s96, %s97
      %p109 = scmp.eq.s32.totalorder %s24, 1
      %p110 = por %p108, %p109
      %p112 = scmp.ne.s32.totalorder %s97, %s111
      %p113 = scmp.eq.s32.totalorder %s24, 0
      %p114 = por %p112, %p113
      %s116 = sadd.s32 %s115, 1
      %p119 = scmp.eq.s32.totalorder %s18, 1
      %p120 = scmp.ne.s32.totalorder %s115, %s117
      %p121 = scmp.eq.s32.totalorder %s18, 0
      %p122 = por %p120, %p121
      %p123 = scmp.ne.s32.totalorder %s115, %s117
      %p124 = scmp.eq.s32.totalorder %s23, 1
      %p125 = por %p123, %p124
      %p126 = scmp.ne.s32.totalorder %s117, %s118
      %p127 = scmp.eq.s32.totalorder %s23, 0
      %p128 = por %p126, %p127
      %p129 = scmp.ne.s32.totalorder %s117, %s118
      %p130 = scmp.eq.s32.totalorder %s24, 1
      %p131 = por %p129, %p130
      %p133 = scmp.ne.s32.totalorder %s118, %s132
      %p134 = scmp.eq.s32.totalorder %s24, 0
      %p135 = por %p133, %p134
      %s137 = sadd.s32 %s136, 1
      %p140 = scmp.eq.s32.totalorder %s18, 1
      %p141 = scmp.ne.s32.totalorder %s136, %s138
      %p142 = scmp.eq.s32.totalorder %s18, 0
      %p143 = por %p141, %p142
      %p144 = scmp.ne.s32.totalorder %s136, %s138
      %p145 = scmp.eq.s32.totalorder %s23, 1
      %p146 = por %p144, %p145
      %p147 = scmp.ne.s32.totalorder %s138, %s139
      %p148 = scmp.eq.s32.totalorder %s23, 0
      %p149 = por %p147, %p148
      %p150 = scmp.ne.s32.totalorder %s138, %s139
      %p151 = scmp.eq.s32.totalorder %s24, 1
      %p152 = por %p150, %p151
      %p154 = scmp.ne.s32.totalorder %s139, %s153
      %p155 = scmp.eq.s32.totalorder %s24, 0
      %p156 = por %p154, %p155
      %s158 = sadd.s32 %s157, 1
      %p161 = scmp.eq.s32.totalorder %s18, 1
      %p162 = scmp.ne.s32.totalorder %s157, %s159
      %p163 = scmp.eq.s32.totalorder %s18, 0
      %p164 = por %p162, %p163
      %p165 = scmp.ne.s32.totalorder %s157, %s159
      %p166 = scmp.eq.s32.totalorder %s23, 1
      %p167 = por %p165, %p166
      %p168 = scmp.ne.s32.totalorder %s159, %s160
      %p169 = scmp.eq.s32.totalorder %s23, 0
      %p170 = por %p168, %p169
      %p171 = scmp.ne.s32.totalorder %s159, %s160
      %p172 = scmp.eq.s32.totalorder %s24, 1
      %p173 = por %p171, %p172
      %p175 = scmp.ne.s32.totalorder %s160, %s174
      %p176 = scmp.eq.s32.totalorder %s24, 0
      %p177 = por %p175, %p176
      %s178 = ssub.s32 %s18, %s25
      %p179 = scmp.eq.s32.totalorder %s178, 0
      %s181 = sadd.s32 %s180, 1
      %s182 = scalar_select %p179, %s180, %s181
      %p185 = pneg %p179
      %p186 = scmp.eq.s32.totalorder %s18, 1
      %p187 = por %p185, %p186
      %p188 = scmp.ne.s32.totalorder %s180, %s183
      %p189 = scmp.eq.s32.totalorder %s18, 0
      %p190 = por %p188, %p189
      %p191 = scmp.ne.s32.totalorder %s180, %s183
      %p192 = scmp.eq.s32.totalorder %s23, 1
      %p193 = por %p191, %p192
      %p194 = scmp.ne.s32.totalorder %s183, %s184
      %p195 = scmp.eq.s32.totalorder %s23, 0
      %p196 = por %p194, %p195
      %p197 = scmp.ne.s32.totalorder %s183, %s184
      %p198 = scmp.eq.s32.totalorder %s24, 1
      %p199 = por %p197, %p198
      %p201 = scmp.ne.s32.totalorder %s184, %s200
      %p202 = scmp.eq.s32.totalorder %s24, 0
      %p203 = por %p201, %p202
      %s204 = ssub.s32 %s18, %s25
      %p205 = scmp.eq.s32.totalorder %s204, 0
      %s207 = sadd.s32 %s206, 1
      %s208 = scalar_select %p205, %s206, %s207
      %p211 = pneg %p205
      %p212 = scmp.eq.s32.totalorder %s18, 1
      %p213 = por %p211, %p212
      %p214 = scmp.ne.s32.totalorder %s206, %s209
      %p215 = scmp.eq.s32.totalorder %s18, 0
      %p216 = por %p214, %p215
      %p217 = scmp.ne.s32.totalorder %s206, %s209
      %p218 = scmp.eq.s32.totalorder %s23, 1
      %p219 = por %p217, %p218
      %p220 = scmp.ne.s32.totalorder %s209, %s210
      %p221 = scmp.eq.s32.totalorder %s23, 0
      %p222 = por %p220, %p221
      %p223 = scmp.ne.s32.totalorder %s209, %s210
      %p224 = scmp.eq.s32.totalorder %s24, 1
      %p225 = por %p223, %p224
      %p227 = scmp.ne.s32.totalorder %s210, %s226
      %p228 = scmp.eq.s32.totalorder %s24, 0
      %p229 = por %p227, %p228
      %p230 = scmp.le.s32.totalorder 1, %s18
      %p231 = scmp.lt.s32.totalorder %s18, 3
      %p232 = pnand %p230, %p231
      %p233 = pneg %p232
      // Predicated region
      $region9: #{gnn_forward.1} parent=5 // pred_check
        _
      $region10: #{gnn_forward.1} parent=5 // pred_check_branch
        %235 = sbr.rel (%p232) target = $region12
      $region11: #{gnn_forward.1} parent=5 // pred_region
        %s236 = ssub.s32 %s18, 1
        // Predicated region
        $region13: #{gnn_forward.1} parent=11 // pred_check
          %p237 = pneg %p65
        $region14: #{gnn_forward.1} parent=11 // pred_check_branch
          %239 = sbr.rel (%p237) target = $region16
        $region15: #{gnn_forward.1} parent=11 // pred_region
          _
        $region16: #{gnn_forward.1} parent=11 // pred_fallthru
          _
        // Predicated region
        $region17: #{gnn_forward.1} parent=11 // pred_check
          %p240 = pneg %p86
        $region18: #{gnn_forward.1} parent=11 // pred_check_branch
          %242 = sbr.rel (%p240) target = $region20
        $region19: #{gnn_forward.1} parent=11 // pred_region
          _
        $region20: #{gnn_forward.1} parent=11 // pred_fallthru
          _
        // Predicated region
        $region21: #{gnn_forward.1} parent=11 // pred_check
          %p243 = pneg %p107
        $region22: #{gnn_forward.1} parent=11 // pred_check_branch
          %245 = sbr.rel (%p243) target = $region24
        $region23: #{gnn_forward.1} parent=11 // pred_region
          _
        $region24: #{gnn_forward.1} parent=11 // pred_fallthru
          _
        // Predicated region
        $region25: #{gnn_forward.1} parent=11 // pred_check
          %p246 = pneg %p128
        $region26: #{gnn_forward.1} parent=11 // pred_check_branch
          %248 = sbr.rel (%p246) target = $region28
        $region27: #{gnn_forward.1} parent=11 // pred_region
          _
        $region28: #{gnn_forward.1} parent=11 // pred_fallthru
          _
        // Predicated region
        $region29: #{gnn_forward.1} parent=11 // pred_check
          %p249 = pneg %p149
        $region30: #{gnn_forward.1} parent=11 // pred_check_branch
          %251 = sbr.rel (%p249) target = $region32
        $region31: #{gnn_forward.1} parent=11 // pred_region
          _
        $region32: #{gnn_forward.1} parent=11 // pred_fallthru
          _
        // Predicated region
        $region33: #{gnn_forward.1} parent=11 // pred_check
          %p252 = pneg %p170
        $region34: #{gnn_forward.1} parent=11 // pred_check_branch
          %254 = sbr.rel (%p252) target = $region36
        $region35: #{gnn_forward.1} parent=11 // pred_region
          _
        $region36: #{gnn_forward.1} parent=11 // pred_fallthru
          _
      $region12: #{gnn_forward.1} parent=5 // pred_fallthru
        _
      %p255 = scmp.lt.s32.totalorder %s18, 2
      // Predicated region
      $region37: #{gnn_forward.1} parent=5 // pred_check
        %p256 = pneg %p255
      $region38: #{gnn_forward.1} parent=5 // pred_check_branch
        %258 = sbr.rel (%p256) target = $region40
      $region39: #{gnn_forward.1} parent=5 // pred_region
        // Predicated region
        $region41: #{gnn_forward.1} parent=39 // pred_check
          %p259 = pneg %p38
        $region42: #{gnn_forward.1} parent=39 // pred_check_branch
          %261 = sbr.rel (%p259) target = $region44
        $region43: #{gnn_forward.1} parent=39 // pred_region
          %s262 = smul.u32 2, %s18
          %p263 = scmp.lt.s32.totalorder %s262, 3
          %s264 = scalar_select %p263, %s262, 3
          %s265 = smul.addr %s264, 4
          %s266 = scalar_lea.vmem %s0, %s265
          %s267 = smul.u32 2, %s18
        $region44: #{gnn_forward.1} parent=39 // pred_fallthru
          _
      $region40: #{gnn_forward.1} parent=5 // pred_fallthru
        _
      %p268 = scmp.le.s32.totalorder 1, %s18
      %p269 = scmp.lt.s32.totalorder %s18, 3
      %p270 = pnand %p268, %p269
      %p271 = pneg %p270
      // Predicated region
      $region45: #{gnn_forward.1} parent=5 // pred_check
        _
      $region46: #{gnn_forward.1} parent=5 // pred_check_branch
        %273 = sbr.rel (%p270) target = $region48
      $region47: #{gnn_forward.1} parent=5 // pred_region
        %s274 = ssub.s32 %s18, 1
        %s275 = smul.u32 2, %s23
        %p276 = scmp.lt.s32.totalorder %s275, 3
        %s277 = scalar_select %p276, %s275, 3
        %s278 = smul.addr %s277, 4
        %s279 = scalar_lea.vmem %s0, %s278
        %p280 = pneg %p44
        %p281 = pneg %p41
        %p282 = pneg %p65
        %p283 = pneg %p62
        %p284 = pneg %p86
        %p285 = pneg %p83
        %p286 = pneg %p107
        %p287 = pneg %p104
        %p288 = pneg %p128
        %p289 = pneg %p125
        %p290 = pneg %p149
        %p291 = pneg %p146
        %p292 = pneg %p170
        %p293 = pneg %p167
        %p294 = pneg %p196
        %p295 = pneg %p193
        %s296 = sand.u32 %s183, 1
        %s297 = scalar_lea.sflag [#allocation3], %s296
        %s298 = sand.u32 %s183, 1
        %s299 = smul.addr %s298, 32
        %s300 = scalar_lea.vmem [#allocation2], %s299
        %p301 = pneg %p222
        %p302 = pneg %p219
        %s303 = smul.u32 2, %s23
        %p304 = scmp.lt.s32.totalorder %s303, 3
        %s305 = scalar_select %p304, %s303, 3
        %s306 = smul.addr %s305, 4
        %s307 = scalar_lea.vmem %s8, %s306
        %s308 = smul.u32 2, %s23
        %p309 = scmp.lt.s32.totalorder %s308, 3
        %s310 = scalar_select %p309, %s308, 3
        %s311 = smul.addr %s310, 4
        %s312 = scalar_lea.vmem %s0, %s311
        %s313 = smul.u32 2, %s23
        %s314 = smul.u32 2, %s23
        %s315 = smul.u32 2, %s23
        %p316 = scmp.lt.s32.totalorder %s315, 3
        %s317 = scalar_select %p316, %s315, 3
        %s318 = smul.addr %s317, 4
        %s319 = scalar_lea.vmem %s8, %s318
        %s320 = smul.u32 2, %s23
        %v322 = vld [vmem:[%s312] sm:$0xf]
        %v323 = vld [vmem:[%s312 + $0x4] sm:$0xf]
        %v324 = vld [vmem:[%s1] sm:$0xff]
        %v325 = vld [vmem:[%s1 + $0x8] sm:$0xff]
        %v326 = vld [vmem:[%s1 + $0x10] sm:$0xff]
        %v327 = vld [vmem:[%s1 + $0x18] sm:$0xf]
        %v328 = vld [vmem:[%s1 + $0x1c] sm:$0xff]
        %v329 = vld [vmem:[%s1 + $0x24] sm:$0xff]
        %v330 = vld [vmem:[%s1 + $0x2c] sm:$0xff]
        %v331 = vld [vmem:[%s1 + $0x34] sm:$0xf]
        %v332 = vld [vmem:[%s1 + $0x38] sm:$0xff]
        %v333 = vld [vmem:[%s1 + $0x40] sm:$0xff]
        %v334 = vld [vmem:[%s1 + $0x48] sm:$0xff]
        %v335 = vld [vmem:[%s1 + $0x50] sm:$0xf]
        %v336 = vld [vmem:[%s1 + $0x54] sm:$0xff]
        %v337 = vld [vmem:[%s1 + $0x5c] sm:$0xff]
        %v338 = vld [vmem:[%s1 + $0x64] sm:$0xff]
        %v339 = vld [vmem:[%s1 + $0x6c] sm:$0xf]
        %v340 = vld [vmem:[%s1 + $0x70] sm:$0xff]
        %v341 = vld [vmem:[%s1 + $0x78] sm:$0xff]
        %v342 = vld [vmem:[%s1 + $0x80] sm:$0xff]
        %v343 = vld [vmem:[%s1 + $0x88] sm:$0xf]
        %v344 = vld [vmem:[%s1 + $0x8c] sm:$0xff]
        %v345 = vld [vmem:[%s1 + $0x94] sm:$0xff]
        %v346 = vld [vmem:[%s1 + $0x9c] sm:$0xff]
        %v347 = vld [vmem:[%s1 + $0xa4] sm:$0xf]
        %v348 = vld [vmem:[%s1 + $0xa8] sm:$0xff]
        %v349 = vld [vmem:[%s1 + $0xb0] sm:$0xff]
        %v350 = vld [vmem:[%s1 + $0xb8] sm:$0xff]
        %v351 = vld [vmem:[%s1 + $0xc0] sm:$0xf]
        %v352 = vld [vmem:[%s2] sm:$0xff]
        %v354 = vlaneseq
        %v355 = vshrl.u32 %v354, 7
        %v356 = vsub.s32 0, %v355
        %v357 = vrot.slane %v352, %v356
        %v358 = vlaneseq
        %v359 = vshrl.u32 %v358, 7
        %v360 = vsub.s32 1, %v359
        %v361 = vrot.slane %v352, %v360
        %v362 = vlaneseq
        %v363 = vshrl.u32 %v362, 7
        %v364 = vsub.s32 2, %v363
        %v365 = vrot.slane %v352, %v364
        %v366 = vlaneseq
        %v367 = vshrl.u32 %v366, 7
        %v368 = vsub.s32 3, %v367
        %v369 = vrot.slane %v352, %v368
        %v370 = vlaneseq
        %v371 = vshrl.u32 %v370, 7
        %v372 = vsub.s32 4, %v371
        %v373 = vrot.slane %v352, %v372
        %v374 = vlaneseq
        %v375 = vshrl.u32 %v374, 7
        %v376 = vsub.s32 5, %v375
        %v377 = vrot.slane %v352, %v376
        %v378 = vlaneseq
        %v379 = vshrl.u32 %v378, 7
        %v380 = vsub.s32 6, %v379
        %v381 = vrot.slane %v352, %v380
        %v391 = vunpack.c.l.b16 %v322
        %v392 = vunpack.c.l.b16 %v323
        %v393 = vpack.c.b16 %v392, %v391
        %v422 = vunpack.c.l.b16 %v324
        %v423 = vunpack.c.h.b16 %v324
        %v424 = vunpack.c.l.b16 %v325
        %v425 = vunpack.c.h.b16 %v325
        %v426 = vunpack.c.l.b16 %v326
        %v427 = vunpack.c.h.b16 %v326
        %v428 = vunpack.c.l.b16 %v327
        %v429 = vunpack.c.l.b16 %v328
        %v430 = vunpack.c.h.b16 %v328
        %v431 = vunpack.c.l.b16 %v329
        %v432 = vunpack.c.h.b16 %v329
        %v433 = vunpack.c.l.b16 %v330
        %v434 = vunpack.c.h.b16 %v330
        %v435 = vunpack.c.l.b16 %v331
        %v436 = vunpack.c.l.b16 %v332
        %v437 = vunpack.c.h.b16 %v332
        %v438 = vunpack.c.l.b16 %v333
        %v439 = vunpack.c.h.b16 %v333
        %v440 = vunpack.c.l.b16 %v334
        %v441 = vunpack.c.h.b16 %v334
        %v442 = vunpack.c.l.b16 %v335
        %v443 = vunpack.c.l.b16 %v336
        %v444 = vunpack.c.h.b16 %v336
        %v445 = vunpack.c.l.b16 %v337
        %v446 = vunpack.c.h.b16 %v337
        %v447 = vunpack.c.l.b16 %v338
        %v448 = vunpack.c.h.b16 %v338
        %v449 = vunpack.c.l.b16 %v339
        %v450 = vunpack.c.l.b16 %v340
        %v451 = vunpack.c.h.b16 %v340
        %v452 = vunpack.c.l.b16 %v341
        %v453 = vunpack.c.h.b16 %v341
        %v454 = vunpack.c.l.b16 %v342
        %v455 = vunpack.c.h.b16 %v342
        %v456 = vunpack.c.l.b16 %v343
        %v457 = vunpack.c.l.b16 %v344
        %v458 = vunpack.c.h.b16 %v344
        %v459 = vunpack.c.l.b16 %v345
        %v460 = vunpack.c.h.b16 %v345
        %v461 = vunpack.c.l.b16 %v346
        %v462 = vunpack.c.h.b16 %v346
        %v463 = vunpack.c.l.b16 %v347
        %v464 = vunpack.c.l.b16 %v348
        %v465 = vunpack.c.h.b16 %v348
        %v466 = vunpack.c.l.b16 %v349
        %v467 = vunpack.c.h.b16 %v349
        %v468 = vunpack.c.l.b16 %v350
        %v469 = vunpack.c.h.b16 %v350
        %v470 = vunpack.c.l.b16 %v351
        %v471 = vpack.c.b16 %v429, %v422
        %v472 = vpack.c.b16 %v430, %v423
        %v473 = vpack.c.b16 %v431, %v424
        %v474 = vpack.c.b16 %v432, %v425
        %v475 = vpack.c.b16 %v433, %v426
        %v476 = vpack.c.b16 %v434, %v427
        %v477 = vpack.c.b16 %v435, %v428
        %v478 = vpack.c.b16 %v443, %v436
        %v479 = vpack.c.b16 %v444, %v437
        %v480 = vpack.c.b16 %v445, %v438
        %v481 = vpack.c.b16 %v446, %v439
        %v482 = vpack.c.b16 %v447, %v440
        %v483 = vpack.c.b16 %v448, %v441
        %v484 = vpack.c.b16 %v449, %v442
        %v485 = vpack.c.b16 %v457, %v450
        %v486 = vpack.c.b16 %v458, %v451
        %v487 = vpack.c.b16 %v459, %v452
        %v488 = vpack.c.b16 %v460, %v453
        %v489 = vpack.c.b16 %v461, %v454
        %v490 = vpack.c.b16 %v462, %v455
        %v491 = vpack.c.b16 %v463, %v456
        %v492 = vpack.c.b16 %v464, %v464
        %v493 = vpack.c.b16 %v465, %v465
        %v494 = vpack.c.b16 %v466, %v466
        %v495 = vpack.c.b16 %v467, %v467
        %v496 = vpack.c.b16 %v468, %v468
        %v497 = vpack.c.b16 %v469, %v469
        %v498 = vpack.c.b16 %v470, %v470
        %vm520 = vcmask 457728
        %v522 = vsel %vm520, %v393, 0
        %vm524 = vcmask 1043456
        %v526 = vsel %vm524, %v492, 0
        %v529 = vsel %vm524, %v493, 0
        %v532 = vsel %vm524, %v494, 0
        %v535 = vsel %vm524, %v495, 0
        %v538 = vsel %vm524, %v496, 0
        %v541 = vsel %vm524, %v497, 0
        %v544 = vsel %vm524, %v498, 0
        %546 = vmatprep.subr.bf16.mxu0 0
        %547 = vmatpush1.bf16.msra.mxu0 0
        %548 = vmatprep.subr.bf16.mxu0 0
        %549 = vmatpush1.bf16.msra.mxu0 0
        %550 = vmatprep.subr.bf16.mxu0 0
        %551 = vmatpush1.bf16.msra.mxu0 0
        %552 = vmatprep.subr.bf16.mxu0 0
        %553 = vmatpush1.bf16.msra.mxu0 0
        %554 = vmatprep.subr.bf16.mxu0 %v529
        %555 = vmatpush1.bf16.msra.mxu0 %v526
        %556 = vmatprep.subr.bf16.mxu0 %v486
        %557 = vmatpush1.bf16.msra.mxu0 %v485
        %558 = vmatprep.subr.bf16.mxu0 %v479
        %559 = vmatpush1.bf16.msra.mxu0 %v478
        %560 = vmatprep.subr.bf16.mxu0 %v472
        %561 = vmatpush1.bf16.msra.mxu0 %v471
        %562 = vmatprep.subr.bf16.mxu0 0
        %563 = vmatpush2.bf16.msra.mxu0 0
        %564 = vmatprep.subr.bf16.mxu0 0
        %565 = vmatpush2.bf16.msra.mxu0 0
        %566 = vmatprep.subr.bf16.mxu0 0
        %567 = vmatpush2.bf16.msra.mxu0 0
        %568 = vmatprep.subr.bf16.mxu0 0
        %569 = vmatpush2.bf16.msra.mxu0 0
        %570 = vmatprep.subr.bf16.mxu0 0
        %571 = vmatpush2.bf16.msra.mxu0 0
        %572 = vmatprep.subr.bf16.mxu0 0
        %573 = vmatpush2.bf16.msra.mxu0 0
        %574 = vmatprep.subr.bf16.mxu0 0
        %575 = vmatpush2.bf16.msra.mxu0 0
        %576 = vmatprep.subr.bf16.mxu0 0
        %577 = vmatpush2.bf16.msra.mxu0 0
        %578 = vmatprep.mubr.bf16.mxu0 0
        %579 = vmatmul.mubr.bf16.gmra.mxu0 %v522
        %v580 = vpop.f32.mrf.mxu0
        %v581 = vadd.f32 %v357, %v580
        %v582 = vpop.f32.mrf.mxu0
        %v583 = vadd.f32 %v361, %v582
        %v584 = vpop.f32.mrf.mxu0
        %v585 = vadd.f32 %v357, %v584
        %v586 = vpop.f32.mrf.mxu0
        %v587 = vadd.f32 %v361, %v586
        %588 = vdwg.mxu0
        %589 = vmatprep.subr.bf16.mxu0 0
        %590 = vmatpush1.bf16.msra.mxu0 0
        %591 = vmatprep.subr.bf16.mxu0 0
        %592 = vmatpush1.bf16.msra.mxu0 0
        %593 = vmatprep.subr.bf16.mxu0 0
        %594 = vmatpush1.bf16.msra.mxu0 0
        %595 = vmatprep.subr.bf16.mxu0 0
        %596 = vmatpush1.bf16.msra.mxu0 0
        %597 = vmatprep.subr.bf16.mxu0 %v535
        %598 = vmatpush1.bf16.msra.mxu0 %v532
        %599 = vmatprep.subr.bf16.mxu0 %v488
        %600 = vmatpush1.bf16.msra.mxu0 %v487
        %601 = vmatprep.subr.bf16.mxu0 %v481
        %602 = vmatpush1.bf16.msra.mxu0 %v480
        %603 = vmatprep.subr.bf16.mxu0 %v474
        %604 = vmatpush1.bf16.msra.mxu0 %v473
        %605 = vmatprep.subr.bf16.mxu0 0
        %606 = vmatpush2.bf16.msra.mxu0 0
        %607 = vmatprep.subr.bf16.mxu0 0
        %608 = vmatpush2.bf16.msra.mxu0 0
        %609 = vmatprep.subr.bf16.mxu0 0
        %610 = vmatpush2.bf16.msra.mxu0 0
        %611 = vmatprep.subr.bf16.mxu0 0
        %612 = vmatpush2.bf16.msra.mxu0 0
        %613 = vmatprep.subr.bf16.mxu0 0
        %614 = vmatpush2.bf16.msra.mxu0 0
        %615 = vmatprep.subr.bf16.mxu0 0
        %616 = vmatpush2.bf16.msra.mxu0 0
        %617 = vmatprep.subr.bf16.mxu0 0
        %618 = vmatpush2.bf16.msra.mxu0 0
        %619 = vmatprep.subr.bf16.mxu0 0
        %620 = vmatpush2.bf16.msra.mxu0 0
        %621 = vmatprep.mubr.bf16.mxu0 0
        %622 = vmatmul.mubr.bf16.gmra.mxu0 %v522
        %v623 = vpop.f32.mrf.mxu0
        %v624 = vadd.f32 %v365, %v623
        %v625 = vpop.f32.mrf.mxu0
        %v626 = vadd.f32 %v369, %v625
        %v627 = vpop.f32.mrf.mxu0
        %v628 = vadd.f32 %v365, %v627
        %v629 = vpop.f32.mrf.mxu0
        %v630 = vadd.f32 %v369, %v629
        %631 = vdwg.mxu0
        %632 = vmatprep.subr.bf16.mxu0 0
        %633 = vmatpush1.bf16.msra.mxu0 0
        %634 = vmatprep.subr.bf16.mxu0 0
        %635 = vmatpush1.bf16.msra.mxu0 0
        %636 = vmatprep.subr.bf16.mxu0 0
        %637 = vmatpush1.bf16.msra.mxu0 0
        %638 = vmatprep.subr.bf16.mxu0 0
        %639 = vmatpush1.bf16.msra.mxu0 0
        %640 = vmatprep.subr.bf16.mxu0 %v541
        %641 = vmatpush1.bf16.msra.mxu0 %v538
        %642 = vmatprep.subr.bf16.mxu0 %v490
        %643 = vmatpush1.bf16.msra.mxu0 %v489
        %644 = vmatprep.subr.bf16.mxu0 %v483
        %645 = vmatpush1.bf16.msra.mxu0 %v482
        %646 = vmatprep.subr.bf16.mxu0 %v476
        %647 = vmatpush1.bf16.msra.mxu0 %v475
        %648 = vmatprep.subr.bf16.mxu0 0
        %649 = vmatpush2.bf16.msra.mxu0 0
        %650 = vmatprep.subr.bf16.mxu0 0
        %651 = vmatpush2.bf16.msra.mxu0 0
        %652 = vmatprep.subr.bf16.mxu0 0
        %653 = vmatpush2.bf16.msra.mxu0 0
        %654 = vmatprep.subr.bf16.mxu0 0
        %655 = vmatpush2.bf16.msra.mxu0 0
        %656 = vmatprep.subr.bf16.mxu0 0
        %657 = vmatpush2.bf16.msra.mxu0 0
        %658 = vmatprep.subr.bf16.mxu0 0
        %659 = vmatpush2.bf16.msra.mxu0 0
        %660 = vmatprep.subr.bf16.mxu0 0
        %661 = vmatpush2.bf16.msra.mxu0 0
        %662 = vmatprep.subr.bf16.mxu0 0
        %663 = vmatpush2.bf16.msra.mxu0 0
        %664 = vmatprep.mubr.bf16.mxu0 0
        %665 = vmatmul.mubr.bf16.gmra.mxu0 %v522
        %v666 = vpop.f32.mrf.mxu0
        %v667 = vadd.f32 %v373, %v666
        %v668 = vpop.f32.mrf.mxu0
        %v669 = vadd.f32 %v377, %v668
        %v670 = vpop.f32.mrf.mxu0
        %v671 = vadd.f32 %v373, %v670
        %v672 = vpop.f32.mrf.mxu0
        %v673 = vadd.f32 %v377, %v672
        %674 = vdwg.mxu0
        %675 = vmatprep.subr.bf16.mxu0 0
        %676 = vmatpush1.bf16.msra.mxu0 0
        %677 = vmatprep.subr.bf16.mxu0 0
        %678 = vmatpush1.bf16.msra.mxu0 0
        %679 = vmatprep.subr.bf16.mxu0 0
        %680 = vmatpush1.bf16.msra.mxu0 0
        %681 = vmatprep.subr.bf16.mxu0 0
        %682 = vmatpush1.bf16.msra.mxu0 0
        %683 = vmatprep.subr.bf16.mxu0 0
        %684 = vmatpush1.bf16.msra.mxu0 %v544
        %685 = vmatprep.subr.bf16.mxu0 0
        %686 = vmatpush1.bf16.msra.mxu0 %v491
        %687 = vmatprep.subr.bf16.mxu0 0
        %688 = vmatpush1.bf16.msra.mxu0 %v484
        %689 = vmatprep.subr.bf16.mxu0 0
        %690 = vmatpush1.bf16.msra.mxu0 %v477
        %691 = vmatprep.subr.bf16.mxu0 0
        %692 = vmatpush2.bf16.msra.mxu0 0
        %693 = vmatprep.subr.bf16.mxu0 0
        %694 = vmatpush2.bf16.msra.mxu0 0
        %695 = vmatprep.subr.bf16.mxu0 0
        %696 = vmatpush2.bf16.msra.mxu0 0
        %697 = vmatprep.subr.bf16.mxu0 0
        %698 = vmatpush2.bf16.msra.mxu0 0
        %699 = vmatprep.subr.bf16.mxu0 0
        %700 = vmatpush2.bf16.msra.mxu0 0
        %701 = vmatprep.subr.bf16.mxu0 0
        %702 = vmatpush2.bf16.msra.mxu0 0
        %703 = vmatprep.subr.bf16.mxu0 0
        %704 = vmatpush2.bf16.msra.mxu0 0
        %705 = vmatprep.subr.bf16.mxu0 0
        %706 = vmatpush2.bf16.msra.mxu0 0
        %707 = vmatprep.mubr.bf16.mxu0 0
        %708 = vmatmul.mubr.bf16.gmra.mxu0 %v522
        %v709 = vpop.f32.mrf.mxu0
        %v710 = vadd.f32 %v381, %v709
        %v711 = vpop.f32.mrf.mxu0
        %v712 = vpop.f32.mrf.mxu0
        %v713 = vadd.f32 %v381, %v712
        %v714 = vpop.f32.mrf.mxu0
        %715 = vdwg.mxu0
        %v716 = vmax.f32 %v581, 0.0
        %v717 = vmax.f32 %v583, 0.0
        %v718 = vmax.f32 %v624, 0.0
        %v719 = vmax.f32 %v626, 0.0
        %v720 = vmax.f32 %v667, 0.0
        %v721 = vmax.f32 %v669, 0.0
        %v722 = vmax.f32 %v710, 0.0
        %v723 = vmax.f32 %v585, 0.0
        %v724 = vmax.f32 %v587, 0.0
        %v725 = vmax.f32 %v628, 0.0
        %v726 = vmax.f32 %v630, 0.0
        %v727 = vmax.f32 %v671, 0.0
        %v728 = vmax.f32 %v673, 0.0
        %v729 = vmax.f32 %v713, 0.0
        %v730 = vpack.c.bf16 %v723, %v716
        %v731 = vpack.c.bf16 %v724, %v717
        %v732 = vpack.c.bf16 %v725, %v718
        %v733 = vpack.c.bf16 %v726, %v719
        %v734 = vpack.c.bf16 %v727, %v720
        %v735 = vpack.c.bf16 %v728, %v721
        %v736 = vpack.c.bf16 %v729, %v722
        %v737 = vld [vmem:[%s3] sm:$0xff]
        %v738 = vld [vmem:[%s3 + $0x8] sm:$0xff]
        %v739 = vld [vmem:[%s3 + $0x10] sm:$0xff]
        %v740 = vld [vmem:[%s3 + $0x18] sm:$0xff]
        %v741 = vld [vmem:[%s3 + $0x20] sm:$0xff]
        %v742 = vld [vmem:[%s3 + $0x28] sm:$0xff]
        %v743 = vld [vmem:[%s3 + $0x30] sm:$0xff]
        %v744 = vld [vmem:[%s3 + $0x38] sm:$0xff]
        %v745 = vld [vmem:[%s3 + $0x40] sm:$0xff]
        %v746 = vld [vmem:[%s3 + $0x48] sm:$0xff]
        %v747 = vld [vmem:[%s3 + $0x50] sm:$0xff]
        %v748 = vld [vmem:[%s3 + $0x58] sm:$0xff]
        %v749 = vld [vmem:[%s3 + $0x60] sm:$0xff]
        %v750 = vld [vmem:[%s3 + $0x68] sm:$0xff]
        %v751 = vld [vmem:[%s3 + $0x70] sm:$0xff]
        %v752 = vld [vmem:[%s3 + $0x78] sm:$0xff]
        %v753 = vld [vmem:[%s3 + $0x80] sm:$0xff]
        %v754 = vld [vmem:[%s3 + $0x88] sm:$0xff]
        %v755 = vld [vmem:[%s3 + $0x90] sm:$0xff]
        %v756 = vld [vmem:[%s3 + $0x98] sm:$0xff]
        %v757 = vld [vmem:[%s3 + $0xa0] sm:$0xff]
        %v758 = vld [vmem:[%s3 + $0xa8] sm:$0xff]
        %v759 = vld [vmem:[%s3 + $0xb0] sm:$0xff]
        %v760 = vld [vmem:[%s3 + $0xb8] sm:$0xff]
        %v761 = vld [vmem:[%s3 + $0xc0] sm:$0xff]
        %v762 = vld [vmem:[%s3 + $0xc8] sm:$0xff]
        %v763 = vld [vmem:[%s3 + $0xd0] sm:$0xff]
        %v764 = vld [vmem:[%s3 + $0xd8] sm:$0xff]
        %v765 = vld [vmem:[%s3 + $0xe0] sm:$0xff]
        %v766 = vld [vmem:[%s3 + $0xe8] sm:$0xff]
        %v767 = vld [vmem:[%s3 + $0xf0] sm:$0xff]
        %v768 = vld [vmem:[%s3 + $0xf8] sm:$0xff]
        %v769 = vld [vmem:[%s3 + $0x100] sm:$0xff]
        %v770 = vld [vmem:[%s3 + $0x108] sm:$0xff]
        %v771 = vld [vmem:[%s3 + $0x110] sm:$0xff]
        %v772 = vld [vmem:[%s3 + $0x118] sm:$0xff]
        %v773 = vld [vmem:[%s3 + $0x120] sm:$0xff]
        %v774 = vld [vmem:[%s3 + $0x128] sm:$0xff]
        %v775 = vld [vmem:[%s3 + $0x130] sm:$0xff]
        %v776 = vld [vmem:[%s3 + $0x138] sm:$0xff]
        %v777 = vld [vmem:[%s3 + $0x140] sm:$0xff]
        %v778 = vld [vmem:[%s3 + $0x148] sm:$0xff]
        %v779 = vld [vmem:[%s3 + $0x150] sm:$0xff]
        %v780 = vld [vmem:[%s3 + $0x158] sm:$0xff]
        %v781 = vld [vmem:[%s3 + $0x160] sm:$0xff]
        %v782 = vld [vmem:[%s3 + $0x168] sm:$0xff]
        %v783 = vld [vmem:[%s3 + $0x170] sm:$0xff]
        %v784 = vld [vmem:[%s3 + $0x178] sm:$0xff]
        %v785 = vld [vmem:[%s3 + $0x180] sm:$0xff]
        %v786 = vld [vmem:[%s3 + $0x188] sm:$0xff]
        %v787 = vld [vmem:[%s3 + $0x190] sm:$0xff]
        %v788 = vld [vmem:[%s3 + $0x198] sm:$0xff]
        %v789 = vld [vmem:[%s3 + $0x1a0] sm:$0xff]
        %v790 = vld [vmem:[%s3 + $0x1a8] sm:$0xff]
        %v791 = vld [vmem:[%s3 + $0x1b0] sm:$0xff]
        %v792 = vld [vmem:[%s3 + $0x1b8] sm:$0xff]
        %v793 = vld [vmem:[%s3 + $0x1c0] sm:$0xff]
        %v794 = vld [vmem:[%s3 + $0x1c8] sm:$0xff]
        %v795 = vld [vmem:[%s3 + $0x1d0] sm:$0xff]
        %v796 = vld [vmem:[%s3 + $0x1d8] sm:$0xff]
        %v797 = vld [vmem:[%s3 + $0x1e0] sm:$0xff]
        %v798 = vld [vmem:[%s3 + $0x1e8] sm:$0xff]
        %v799 = vld [vmem:[%s3 + $0x1f0] sm:$0xff]
        %v800 = vld [vmem:[%s3 + $0x1f8] sm:$0xff]
        %v801 = vld [vmem:[%s3 + $0x200] sm:$0xff]
        %v802 = vld [vmem:[%s3 + $0x208] sm:$0xff]
        %v803 = vld [vmem:[%s3 + $0x210] sm:$0xff]
        %v804 = vld [vmem:[%s3 + $0x218] sm:$0xff]
        %v805 = vld [vmem:[%s3 + $0x220] sm:$0xff]
        %v806 = vld [vmem:[%s3 + $0x228] sm:$0xff]
        %v807 = vld [vmem:[%s3 + $0x230] sm:$0xff]
        %v808 = vld [vmem:[%s3 + $0x238] sm:$0xff]
        %v809 = vld [vmem:[%s3 + $0x240] sm:$0xff]
        %v810 = vld [vmem:[%s3 + $0x248] sm:$0xff]
        %v811 = vld [vmem:[%s3 + $0x250] sm:$0xff]
        %v812 = vld [vmem:[%s3 + $0x258] sm:$0xff]
        %v813 = vld [vmem:[%s3 + $0x260] sm:$0xff]
        %v814 = vld [vmem:[%s3 + $0x268] sm:$0xff]
        %v815 = vld [vmem:[%s3 + $0x270] sm:$0xff]
        %v816 = vld [vmem:[%s3 + $0x278] sm:$0xff]
        %v817 = vld [vmem:[%s3 + $0x280] sm:$0xff]
        %v818 = vld [vmem:[%s3 + $0x288] sm:$0xff]
        %v819 = vld [vmem:[%s3 + $0x290] sm:$0xff]
        %v820 = vld [vmem:[%s3 + $0x298] sm:$0xff]
        %v821 = vld [vmem:[%s3 + $0x2a0] sm:$0xff]
        %v822 = vld [vmem:[%s3 + $0x2a8] sm:$0xff]
        %v823 = vld [vmem:[%s3 + $0x2b0] sm:$0xff]
        %v824 = vld [vmem:[%s3 + $0x2b8] sm:$0xff]
        %v825 = vld [vmem:[%s3 + $0x2c0] sm:$0xff]
        %v826 = vld [vmem:[%s3 + $0x2c8] sm:$0xff]
        %v827 = vld [vmem:[%s3 + $0x2d0] sm:$0xff]
        %v828 = vld [vmem:[%s3 + $0x2d8] sm:$0xff]
        %v829 = vld [vmem:[%s3 + $0x2e0] sm:$0xff]
        %v830 = vld [vmem:[%s3 + $0x2e8] sm:$0xff]
        %v831 = vld [vmem:[%s3 + $0x2f0] sm:$0xff]
        %v832 = vld [vmem:[%s3 + $0x2f8] sm:$0xff]
        %v833 = vld [vmem:[%s3 + $0x300] sm:$0xff]
        %v834 = vld [vmem:[%s3 + $0x308] sm:$0xff]
        %v835 = vld [vmem:[%s3 + $0x310] sm:$0xff]
        %v836 = vld [vmem:[%s3 + $0x318] sm:$0xff]
        %v837 = vld [vmem:[%s3 + $0x320] sm:$0xff]
        %v838 = vld [vmem:[%s3 + $0x328] sm:$0xff]
        %v839 = vld [vmem:[%s3 + $0x330] sm:$0xff]
        %v840 = vld [vmem:[%s3 + $0x338] sm:$0xff]
        %v841 = vld [vmem:[%s3 + $0x340] sm:$0xff]
        %v842 = vld [vmem:[%s3 + $0x348] sm:$0xff]
        %v843 = vld [vmem:[%s3 + $0x350] sm:$0xff]
        %v844 = vld [vmem:[%s3 + $0x358] sm:$0xff]
        %v845 = vld [vmem:[%s3 + $0x360] sm:$0xff]
        %v846 = vld [vmem:[%s3 + $0x368] sm:$0xff]
        %v847 = vld [vmem:[%s3 + $0x370] sm:$0xff]
        %v848 = vld [vmem:[%s3 + $0x378] sm:$0xff]
        %v849 = vld [vmem:[%s4] sm:$0x3]
        %v851 = vlaneseq
        %v852 = vshrl.u32 %v851, 7
        %v853 = vsub.s32 0, %v852
        %v854 = vrot.slane %v849, %v853
        %v855 = vlaneseq
        %v856 = vshrl.u32 %v855, 7
        %v857 = vsub.s32 1, %v856
        %v858 = vrot.slane %v849, %v857
        %v973 = vunpack.c.l.b16 %v737
        %v974 = vunpack.c.h.b16 %v737
        %v975 = vunpack.c.l.b16 %v738
        %v976 = vunpack.c.h.b16 %v738
        %v977 = vunpack.c.l.b16 %v739
        %v978 = vunpack.c.h.b16 %v739
        %v979 = vunpack.c.l.b16 %v740
        %v980 = vunpack.c.h.b16 %v740
        %v981 = vunpack.c.l.b16 %v741
        %v982 = vunpack.c.h.b16 %v741
        %v983 = vunpack.c.l.b16 %v742
        %v984 = vunpack.c.h.b16 %v742
        %v985 = vunpack.c.l.b16 %v743
        %v986 = vunpack.c.h.b16 %v743
        %v987 = vunpack.c.l.b16 %v744
        %v988 = vunpack.c.h.b16 %v744
        %v989 = vunpack.c.l.b16 %v745
        %v990 = vunpack.c.h.b16 %v745
        %v991 = vunpack.c.l.b16 %v746
        %v992 = vunpack.c.h.b16 %v746
        %v993 = vunpack.c.l.b16 %v747
        %v994 = vunpack.c.h.b16 %v747
        %v995 = vunpack.c.l.b16 %v748
        %v996 = vunpack.c.h.b16 %v748
        %v997 = vunpack.c.l.b16 %v749
        %v998 = vunpack.c.h.b16 %v749
        %v999 = vunpack.c.l.b16 %v750
        %v1000 = vunpack.c.h.b16 %v750
        %v1001 = vunpack.c.l.b16 %v751
        %v1002 = vunpack.c.h.b16 %v751
        %v1003 = vunpack.c.l.b16 %v752
        %v1004 = vunpack.c.h.b16 %v752
        %v1005 = vunpack.c.l.b16 %v753
        %v1006 = vunpack.c.h.b16 %v753
        %v1007 = vunpack.c.l.b16 %v754
        %v1008 = vunpack.c.h.b16 %v754
        %v1009 = vunpack.c.l.b16 %v755
        %v1010 = vunpack.c.h.b16 %v755
        %v1011 = vunpack.c.l.b16 %v756
        %v1012 = vunpack.c.h.b16 %v756
        %v1013 = vunpack.c.l.b16 %v757
        %v1014 = vunpack.c.h.b16 %v757
        %v1015 = vunpack.c.l.b16 %v758
        %v1016 = vunpack.c.h.b16 %v758
        %v1017 = vunpack.c.l.b16 %v759
        %v1018 = vunpack.c.h.b16 %v759
        %v1019 = vunpack.c.l.b16 %v760
        %v1020 = vunpack.c.h.b16 %v760
        %v1021 = vunpack.c.l.b16 %v761
        %v1022 = vunpack.c.h.b16 %v761
        %v1023 = vunpack.c.l.b16 %v762
        %v1024 = vunpack.c.h.b16 %v762
        %v1025 = vunpack.c.l.b16 %v763
        %v1026 = vunpack.c.h.b16 %v763
        %v1027 = vunpack.c.l.b16 %v764
        %v1028 = vunpack.c.h.b16 %v764
        %v1029 = vunpack.c.l.b16 %v765
        %v1030 = vunpack.c.h.b16 %v765
        %v1031 = vunpack.c.l.b16 %v766
        %v1032 = vunpack.c.h.b16 %v766
        %v1033 = vunpack.c.l.b16 %v767
        %v1034 = vunpack.c.h.b16 %v767
        %v1035 = vunpack.c.l.b16 %v768
        %v1036 = vunpack.c.h.b16 %v768
        %v1037 = vunpack.c.l.b16 %v769
        %v1038 = vunpack.c.h.b16 %v769
        %v1039 = vunpack.c.l.b16 %v770
        %v1040 = vunpack.c.h.b16 %v770
        %v1041 = vunpack.c.l.b16 %v771
        %v1042 = vunpack.c.h.b16 %v771
        %v1043 = vunpack.c.l.b16 %v772
        %v1044 = vunpack.c.h.b16 %v772
        %v1045 = vunpack.c.l.b16 %v773
        %v1046 = vunpack.c.h.b16 %v773
        %v1047 = vunpack.c.l.b16 %v774
        %v1048 = vunpack.c.h.b16 %v774
        %v1049 = vunpack.c.l.b16 %v775
        %v1050 = vunpack.c.h.b16 %v775
        %v1051 = vunpack.c.l.b16 %v776
        %v1052 = vunpack.c.h.b16 %v776
        %v1053 = vunpack.c.l.b16 %v777
        %v1054 = vunpack.c.h.b16 %v777
        %v1055 = vunpack.c.l.b16 %v778
        %v1056 = vunpack.c.h.b16 %v778
        %v1057 = vunpack.c.l.b16 %v779
        %v1058 = vunpack.c.h.b16 %v779
        %v1059 = vunpack.c.l.b16 %v780
        %v1060 = vunpack.c.h.b16 %v780
        %v1061 = vunpack.c.l.b16 %v781
        %v1062 = vunpack.c.h.b16 %v781
        %v1063 = vunpack.c.l.b16 %v782
        %v1064 = vunpack.c.h.b16 %v782
        %v1065 = vunpack.c.l.b16 %v783
        %v1066 = vunpack.c.h.b16 %v783
        %v1067 = vunpack.c.l.b16 %v784
        %v1068 = vunpack.c.h.b16 %v784
        %v1069 = vunpack.c.l.b16 %v785
        %v1070 = vunpack.c.h.b16 %v785
        %v1071 = vunpack.c.l.b16 %v786
        %v1072 = vunpack.c.h.b16 %v786
        %v1073 = vunpack.c.l.b16 %v787
        %v1074 = vunpack.c.h.b16 %v787
        %v1075 = vunpack.c.l.b16 %v788
        %v1076 = vunpack.c.h.b16 %v788
        %v1077 = vunpack.c.l.b16 %v789
        %v1078 = vunpack.c.h.b16 %v789
        %v1079 = vunpack.c.l.b16 %v790
        %v1080 = vunpack.c.h.b16 %v790
        %v1081 = vunpack.c.l.b16 %v791
        %v1082 = vunpack.c.h.b16 %v791
        %v1083 = vunpack.c.l.b16 %v792
        %v1084 = vunpack.c.h.b16 %v792
        %v1085 = vunpack.c.l.b16 %v793
        %v1086 = vunpack.c.h.b16 %v793
        %v1087 = vunpack.c.l.b16 %v794
        %v1088 = vunpack.c.h.b16 %v794
        %v1089 = vunpack.c.l.b16 %v795
        %v1090 = vunpack.c.h.b16 %v795
        %v1091 = vunpack.c.l.b16 %v796
        %v1092 = vunpack.c.h.b16 %v796
        %v1093 = vunpack.c.l.b16 %v797
        %v1094 = vunpack.c.h.b16 %v797
        %v1095 = vunpack.c.l.b16 %v798
        %v1096 = vunpack.c.h.b16 %v798
        %v1097 = vunpack.c.l.b16 %v799
        %v1098 = vunpack.c.h.b16 %v799
        %v1099 = vunpack.c.l.b16 %v800
        %v1100 = vunpack.c.h.b16 %v800
        %v1101 = vunpack.c.l.b16 %v801
        %v1102 = vunpack.c.h.b16 %v801
        %v1103 = vunpack.c.l.b16 %v802
        %v1104 = vunpack.c.h.b16 %v802
        %v1105 = vunpack.c.l.b16 %v803
        %v1106 = vunpack.c.h.b16 %v803
        %v1107 = vunpack.c.l.b16 %v804
        %v1108 = vunpack.c.h.b16 %v804
        %v1109 = vunpack.c.l.b16 %v805
        %v1110 = vunpack.c.h.b16 %v805
        %v1111 = vunpack.c.l.b16 %v806
        %v1112 = vunpack.c.h.b16 %v806
        %v1113 = vunpack.c.l.b16 %v807
        %v1114 = vunpack.c.h.b16 %v807
        %v1115 = vunpack.c.l.b16 %v808
        %v1116 = vunpack.c.h.b16 %v808
        %v1117 = vunpack.c.l.b16 %v809
        %v1118 = vunpack.c.h.b16 %v809
        %v1119 = vunpack.c.l.b16 %v810
        %v1120 = vunpack.c.h.b16 %v810
        %v1121 = vunpack.c.l.b16 %v811
        %v1122 = vunpack.c.h.b16 %v811
        %v1123 = vunpack.c.l.b16 %v812
        %v1124 = vunpack.c.h.b16 %v812
        %v1125 = vunpack.c.l.b16 %v813
        %v1126 = vunpack.c.h.b16 %v813
        %v1127 = vunpack.c.l.b16 %v814
        %v1128 = vunpack.c.h.b16 %v814
        %v1129 = vunpack.c.l.b16 %v815
        %v1130 = vunpack.c.h.b16 %v815
        %v1131 = vunpack.c.l.b16 %v816
        %v1132 = vunpack.c.h.b16 %v816
        %v1133 = vunpack.c.l.b16 %v817
        %v1134 = vunpack.c.h.b16 %v817
        %v1135 = vunpack.c.l.b16 %v818
        %v1136 = vunpack.c.h.b16 %v818
        %v1137 = vunpack.c.l.b16 %v819
        %v1138 = vunpack.c.h.b16 %v819
        %v1139 = vunpack.c.l.b16 %v820
        %v1140 = vunpack.c.h.b16 %v820
        %v1141 = vunpack.c.l.b16 %v821
        %v1142 = vunpack.c.h.b16 %v821
        %v1143 = vunpack.c.l.b16 %v822
        %v1144 = vunpack.c.h.b16 %v822
        %v1145 = vunpack.c.l.b16 %v823
        %v1146 = vunpack.c.h.b16 %v823
        %v1147 = vunpack.c.l.b16 %v824
        %v1148 = vunpack.c.h.b16 %v824
        %v1149 = vunpack.c.l.b16 %v825
        %v1150 = vunpack.c.h.b16 %v825
        %v1151 = vunpack.c.l.b16 %v826
        %v1152 = vunpack.c.h.b16 %v826
        %v1153 = vunpack.c.l.b16 %v827
        %v1154 = vunpack.c.h.b16 %v827
        %v1155 = vunpack.c.l.b16 %v828
        %v1156 = vunpack.c.h.b16 %v828
        %v1157 = vunpack.c.l.b16 %v829
        %v1158 = vunpack.c.h.b16 %v829
        %v1159 = vunpack.c.l.b16 %v830
        %v1160 = vunpack.c.h.b16 %v830
        %v1161 = vunpack.c.l.b16 %v831
        %v1162 = vunpack.c.h.b16 %v831
        %v1163 = vunpack.c.l.b16 %v832
        %v1164 = vunpack.c.h.b16 %v832
        %v1165 = vunpack.c.l.b16 %v833
        %v1166 = vunpack.c.h.b16 %v833
        %v1167 = vunpack.c.l.b16 %v834
        %v1168 = vunpack.c.h.b16 %v834
        %v1169 = vunpack.c.l.b16 %v835
        %v1170 = vunpack.c.h.b16 %v835
        %v1171 = vunpack.c.l.b16 %v836
        %v1172 = vunpack.c.h.b16 %v836
        %v1173 = vunpack.c.l.b16 %v837
        %v1174 = vunpack.c.h.b16 %v837
        %v1175 = vunpack.c.l.b16 %v838
        %v1176 = vunpack.c.h.b16 %v838
        %v1177 = vunpack.c.l.b16 %v839
        %v1178 = vunpack.c.h.b16 %v839
        %v1179 = vunpack.c.l.b16 %v840
        %v1180 = vunpack.c.h.b16 %v840
        %v1181 = vunpack.c.l.b16 %v841
        %v1182 = vunpack.c.h.b16 %v841
        %v1183 = vunpack.c.l.b16 %v842
        %v1184 = vunpack.c.h.b16 %v842
        %v1185 = vunpack.c.l.b16 %v843
        %v1186 = vunpack.c.h.b16 %v843
        %v1187 = vunpack.c.l.b16 %v844
        %v1188 = vunpack.c.h.b16 %v844
        %v1189 = vunpack.c.l.b16 %v845
        %v1190 = vunpack.c.h.b16 %v845
        %v1191 = vunpack.c.l.b16 %v846
        %v1192 = vunpack.c.h.b16 %v846
        %v1193 = vunpack.c.l.b16 %v847
        %v1194 = vunpack.c.h.b16 %v847
        %v1195 = vunpack.c.l.b16 %v848
        %v1196 = vunpack.c.h.b16 %v848
        %v1197 = vpack.c.b16 %v975, %v973
        %v1198 = vpack.c.b16 %v976, %v974
        %v1199 = vpack.c.b16 %v979, %v977
        %v1200 = vpack.c.b16 %v980, %v978
        %v1201 = vpack.c.b16 %v983, %v981
        %v1202 = vpack.c.b16 %v984, %v982
        %v1203 = vpack.c.b16 %v987, %v985
        %v1204 = vpack.c.b16 %v988, %v986
        %v1205 = vpack.c.b16 %v991, %v989
        %v1206 = vpack.c.b16 %v992, %v990
        %v1207 = vpack.c.b16 %v995, %v993
        %v1208 = vpack.c.b16 %v996, %v994
        %v1209 = vpack.c.b16 %v999, %v997
        %v1210 = vpack.c.b16 %v1000, %v998
        %v1211 = vpack.c.b16 %v1003, %v1001
        %v1212 = vpack.c.b16 %v1004, %v1002
        %v1213 = vpack.c.b16 %v1007, %v1005
        %v1214 = vpack.c.b16 %v1008, %v1006
        %v1215 = vpack.c.b16 %v1011, %v1009
        %v1216 = vpack.c.b16 %v1012, %v1010
        %v1217 = vpack.c.b16 %v1015, %v1013
        %v1218 = vpack.c.b16 %v1016, %v1014
        %v1219 = vpack.c.b16 %v1019, %v1017
        %v1220 = vpack.c.b16 %v1020, %v1018
        %v1221 = vpack.c.b16 %v1023, %v1021
        %v1222 = vpack.c.b16 %v1024, %v1022
        %v1223 = vpack.c.b16 %v1027, %v1025
        %v1224 = vpack.c.b16 %v1028, %v1026
        %v1225 = vpack.c.b16 %v1031, %v1029
        %v1226 = vpack.c.b16 %v1032, %v1030
        %v1227 = vpack.c.b16 %v1035, %v1033
        %v1228 = vpack.c.b16 %v1036, %v1034
        %v1229 = vpack.c.b16 %v1039, %v1037
        %v1230 = vpack.c.b16 %v1040, %v1038
        %v1231 = vpack.c.b16 %v1043, %v1041
        %v1232 = vpack.c.b16 %v1044, %v1042
        %v1233 = vpack.c.b16 %v1047, %v1045
        %v1234 = vpack.c.b16 %v1048, %v1046
        %v1235 = vpack.c.b16 %v1051, %v1049
        %v1236 = vpack.c.b16 %v1052, %v1050
        %v1237 = vpack.c.b16 %v1055, %v1053
        %v1238 = vpack.c.b16 %v1056, %v1054
        %v1239 = vpack.c.b16 %v1059, %v1057
        %v1240 = vpack.c.b16 %v1060, %v1058
        %v1241 = vpack.c.b16 %v1063, %v1061
        %v1242 = vpack.c.b16 %v1064, %v1062
        %v1243 = vpack.c.b16 %v1067, %v1065
        %v1244 = vpack.c.b16 %v1068, %v1066
        %v1245 = vpack.c.b16 %v1071, %v1069
        %v1246 = vpack.c.b16 %v1072, %v1070
        %v1247 = vpack.c.b16 %v1075, %v1073
        %v1248 = vpack.c.b16 %v1076, %v1074
        %v1249 = vpack.c.b16 %v1079, %v1077
        %v1250 = vpack.c.b16 %v1080, %v1078
        %v1251 = vpack.c.b16 %v1083, %v1081
        %v1252 = vpack.c.b16 %v1084, %v1082
        %v1253 = vpack.c.b16 %v1087, %v1085
        %v1254 = vpack.c.b16 %v1088, %v1086
        %v1255 = vpack.c.b16 %v1091, %v1089
        %v1256 = vpack.c.b16 %v1092, %v1090
        %v1257 = vpack.c.b16 %v1095, %v1093
        %v1258 = vpack.c.b16 %v1096, %v1094
        %v1259 = vpack.c.b16 %v1099, %v1097
        %v1260 = vpack.c.b16 %v1100, %v1098
        %v1261 = vpack.c.b16 %v1103, %v1101
        %v1262 = vpack.c.b16 %v1104, %v1102
        %v1263 = vpack.c.b16 %v1107, %v1105
        %v1264 = vpack.c.b16 %v1108, %v1106
        %v1265 = vpack.c.b16 %v1111, %v1109
        %v1266 = vpack.c.b16 %v1112, %v1110
        %v1267 = vpack.c.b16 %v1115, %v1113
        %v1268 = vpack.c.b16 %v1116, %v1114
        %v1269 = vpack.c.b16 %v1119, %v1117
        %v1270 = vpack.c.b16 %v1120, %v1118
        %v1271 = vpack.c.b16 %v1123, %v1121
        %v1272 = vpack.c.b16 %v1124, %v1122
        %v1273 = vpack.c.b16 %v1127, %v1125
        %v1274 = vpack.c.b16 %v1128, %v1126
        %v1275 = vpack.c.b16 %v1131, %v1129
        %v1276 = vpack.c.b16 %v1132, %v1130
        %v1277 = vpack.c.b16 %v1135, %v1133
        %v1278 = vpack.c.b16 %v1136, %v1134
        %v1279 = vpack.c.b16 %v1139, %v1137
        %v1280 = vpack.c.b16 %v1140, %v1138
        %v1281 = vpack.c.b16 %v1143, %v1141
        %v1282 = vpack.c.b16 %v1144, %v1142
        %v1283 = vpack.c.b16 %v1147, %v1145
        %v1284 = vpack.c.b16 %v1148, %v1146
        %v1285 = vpack.c.b16 %v1151, %v1149
        %v1286 = vpack.c.b16 %v1152, %v1150
        %v1287 = vpack.c.b16 %v1155, %v1153
        %v1288 = vpack.c.b16 %v1156, %v1154
        %v1289 = vpack.c.b16 %v1159, %v1157
        %v1290 = vpack.c.b16 %v1160, %v1158
        %v1291 = vpack.c.b16 %v1163, %v1161
        %v1292 = vpack.c.b16 %v1164, %v1162
        %v1293 = vpack.c.b16 %v1167, %v1165
        %v1294 = vpack.c.b16 %v1168, %v1166
        %v1295 = vpack.c.b16 %v1171, %v1169
        %v1296 = vpack.c.b16 %v1172, %v1170
        %v1297 = vpack.c.b16 %v1175, %v1173
        %v1298 = vpack.c.b16 %v1176, %v1174
        %v1299 = vpack.c.b16 %v1179, %v1177
        %v1300 = vpack.c.b16 %v1180, %v1178
        %v1301 = vpack.c.b16 %v1183, %v1181
        %v1302 = vpack.c.b16 %v1184, %v1182
        %v1303 = vpack.c.b16 %v1187, %v1185
        %v1304 = vpack.c.b16 %v1188, %v1186
        %v1305 = vpack.c.b16 %v1191, %v1189
        %v1306 = vpack.c.b16 %v1192, %v1190
        %v1307 = vpack.c.b16 %v1195, %v1193
        %v1308 = vpack.c.b16 %v1196, %v1194
        %1421 = vmatprep.subr.bf16.mxu0 %v1212
        %1422 = vmatpush1.bf16.msra.mxu0 %v1211
        %1423 = vmatprep.subr.bf16.mxu0 %v1210
        %1424 = vmatpush1.bf16.msra.mxu0 %v1209
        %1425 = vmatprep.subr.bf16.mxu0 %v1208
        %1426 = vmatpush1.bf16.msra.mxu0 %v1207
        %1427 = vmatprep.subr.bf16.mxu0 %v1206
        %1428 = vmatpush1.bf16.msra.mxu0 %v1205
        %1429 = vmatprep.subr.bf16.mxu0 %v1204
        %1430 = vmatpush1.bf16.msra.mxu0 %v1203
        %1431 = vmatprep.subr.bf16.mxu0 %v1202
        %1432 = vmatpush1.bf16.msra.mxu0 %v1201
        %1433 = vmatprep.subr.bf16.mxu0 %v1200
        %1434 = vmatpush1.bf16.msra.mxu0 %v1199
        %1435 = vmatprep.subr.bf16.mxu0 %v1198
        %1436 = vmatpush1.bf16.msra.mxu0 %v1197
        %1437 = vmatprep.subr.bf16.mxu0 %v1228
        %1438 = vmatpush2.bf16.msra.mxu0 %v1227
        %1439 = vmatprep.subr.bf16.mxu0 %v1226
        %1440 = vmatpush2.bf16.msra.mxu0 %v1225
        %1441 = vmatprep.subr.bf16.mxu0 %v1224
        %1442 = vmatpush2.bf16.msra.mxu0 %v1223
        %1443 = vmatprep.subr.bf16.mxu0 %v1222
        %1444 = vmatpush2.bf16.msra.mxu0 %v1221
        %1445 = vmatprep.subr.bf16.mxu0 %v1220
        %1446 = vmatpush2.bf16.msra.mxu0 %v1219
        %1447 = vmatprep.subr.bf16.mxu0 %v1218
        %1448 = vmatpush2.bf16.msra.mxu0 %v1217
        %1449 = vmatprep.subr.bf16.mxu0 %v1216
        %1450 = vmatpush2.bf16.msra.mxu0 %v1215
        %1451 = vmatprep.subr.bf16.mxu0 %v1214
        %1452 = vmatpush2.bf16.msra.mxu0 %v1213
        %1453 = vmatprep.mubr.bf16.mxu0 %v731
        %1454 = vmatmul.mubr.bf16.gmra.mxu0 %v730
        %v1455 = vpop.f32.mrf.mxu0
        %v1456 = vadd.f32 %v854, %v1455
        %v1457 = vpop.f32.mrf.mxu0
        %v1458 = vadd.f32 %v858, %v1457
        %v1459 = vpop.f32.mrf.mxu0
        %v1460 = vadd.f32 %v854, %v1459
        %v1461 = vpop.f32.mrf.mxu0
        %v1462 = vadd.f32 %v858, %v1461
        %1463 = vdwg.mxu0
        %1464 = vmatprep.subr.bf16.mxu0 %v1244
        %1465 = vmatpush1.bf16.msra.mxu0 %v1243
        %1466 = vmatprep.subr.bf16.mxu0 %v1242
        %1467 = vmatpush1.bf16.msra.mxu0 %v1241
        %1468 = vmatprep.subr.bf16.mxu0 %v1240
        %1469 = vmatpush1.bf16.msra.mxu0 %v1239
        %1470 = vmatprep.subr.bf16.mxu0 %v1238
        %1471 = vmatpush1.bf16.msra.mxu0 %v1237
        %1472 = vmatprep.subr.bf16.mxu0 %v1236
        %1473 = vmatpush1.bf16.msra.mxu0 %v1235
        %1474 = vmatprep.subr.bf16.mxu0 %v1234
        %1475 = vmatpush1.bf16.msra.mxu0 %v1233
        %1476 = vmatprep.subr.bf16.mxu0 %v1232
        %1477 = vmatpush1.bf16.msra.mxu0 %v1231
        %1478 = vmatprep.subr.bf16.mxu0 %v1230
        %1479 = vmatpush1.bf16.msra.mxu0 %v1229
        %1480 = vmatprep.subr.bf16.mxu0 %v1260
        %1481 = vmatpush2.bf16.msra.mxu0 %v1259
        %1482 = vmatprep.subr.bf16.mxu0 %v1258
        %1483 = vmatpush2.bf16.msra.mxu0 %v1257
        %1484 = vmatprep.subr.bf16.mxu0 %v1256
        %1485 = vmatpush2.bf16.msra.mxu0 %v1255
        %1486 = vmatprep.subr.bf16.mxu0 %v1254
        %1487 = vmatpush2.bf16.msra.mxu0 %v1253
        %1488 = vmatprep.subr.bf16.mxu0 %v1252
        %1489 = vmatpush2.bf16.msra.mxu0 %v1251
        %1490 = vmatprep.subr.bf16.mxu0 %v1250
        %1491 = vmatpush2.bf16.msra.mxu0 %v1249
        %1492 = vmatprep.subr.bf16.mxu0 %v1248
        %1493 = vmatpush2.bf16.msra.mxu0 %v1247
        %1494 = vmatprep.subr.bf16.mxu0 %v1246
        %1495 = vmatpush2.bf16.msra.mxu0 %v1245
        %1496 = vmatprep.mubr.bf16.mxu0 %v733
        %1497 = vmatmul.mubr.bf16.gmra.mxu0 %v732
        %v1498 = vpop.f32.mrf.mxu0
        %v1499 = vadd.f32 %v1456, %v1498
        %v1500 = vpop.f32.mrf.mxu0
        %v1501 = vadd.f32 %v1458, %v1500
        %v1502 = vpop.f32.mrf.mxu0
        %v1503 = vadd.f32 %v1460, %v1502
        %v1504 = vpop.f32.mrf.mxu0
        %v1505 = vadd.f32 %v1462, %v1504
        %1506 = vdwg.mxu0
        %1507 = vmatprep.subr.bf16.mxu0 %v1276
        %1508 = vmatpush1.bf16.msra.mxu0 %v1275
        %1509 = vmatprep.subr.bf16.mxu0 %v1274
        %1510 = vmatpush1.bf16.msra.mxu0 %v1273
        %1511 = vmatprep.subr.bf16.mxu0 %v1272
        %1512 = vmatpush1.bf16.msra.mxu0 %v1271
        %1513 = vmatprep.subr.bf16.mxu0 %v1270
        %1514 = vmatpush1.bf16.msra.mxu0 %v1269
        %1515 = vmatprep.subr.bf16.mxu0 %v1268
        %1516 = vmatpush1.bf16.msra.mxu0 %v1267
        %1517 = vmatprep.subr.bf16.mxu0 %v1266
        %1518 = vmatpush1.bf16.msra.mxu0 %v1265
        %1519 = vmatprep.subr.bf16.mxu0 %v1264
        %1520 = vmatpush1.bf16.msra.mxu0 %v1263
        %1521 = vmatprep.subr.bf16.mxu0 %v1262
        %1522 = vmatpush1.bf16.msra.mxu0 %v1261
        %1523 = vmatprep.subr.bf16.mxu0 %v1292
        %1524 = vmatpush2.bf16.msra.mxu0 %v1291
        %1525 = vmatprep.subr.bf16.mxu0 %v1290
        %1526 = vmatpush2.bf16.msra.mxu0 %v1289
        %1527 = vmatprep.subr.bf16.mxu0 %v1288
        %1528 = vmatpush2.bf16.msra.mxu0 %v1287
        %1529 = vmatprep.subr.bf16.mxu0 %v1286
        %1530 = vmatpush2.bf16.msra.mxu0 %v1285
        %1531 = vmatprep.subr.bf16.mxu0 %v1284
        %1532 = vmatpush2.bf16.msra.mxu0 %v1283
        %1533 = vmatprep.subr.bf16.mxu0 %v1282
        %1534 = vmatpush2.bf16.msra.mxu0 %v1281
        %1535 = vmatprep.subr.bf16.mxu0 %v1280
        %1536 = vmatpush2.bf16.msra.mxu0 %v1279
        %1537 = vmatprep.subr.bf16.mxu0 %v1278
        %1538 = vmatpush2.bf16.msra.mxu0 %v1277
        %1539 = vmatprep.mubr.bf16.mxu0 %v735
        %1540 = vmatmul.mubr.bf16.gmra.mxu0 %v734
        %v1541 = vpop.f32.mrf.mxu0
        %v1542 = vadd.f32 %v1499, %v1541
        %v1543 = vpop.f32.mrf.mxu0
        %v1544 = vadd.f32 %v1501, %v1543
        %v1545 = vpop.f32.mrf.mxu0
        %v1546 = vadd.f32 %v1503, %v1545
        %v1547 = vpop.f32.mrf.mxu0
        %v1548 = vadd.f32 %v1505, %v1547
        %1549 = vdwg.mxu0
        %1550 = vmatprep.subr.bf16.mxu0 %v1308
        %1551 = vmatpush1.bf16.msra.mxu0 %v1307
        %1552 = vmatprep.subr.bf16.mxu0 %v1306
        %1553 = vmatpush1.bf16.msra.mxu0 %v1305
        %1554 = vmatprep.subr.bf16.mxu0 %v1304
        %1555 = vmatpush1.bf16.msra.mxu0 %v1303
        %1556 = vmatprep.subr.bf16.mxu0 %v1302
        %1557 = vmatpush1.bf16.msra.mxu0 %v1301
        %1558 = vmatprep.subr.bf16.mxu0 %v1300
        %1559 = vmatpush1.bf16.msra.mxu0 %v1299
        %1560 = vmatprep.subr.bf16.mxu0 %v1298
        %1561 = vmatpush1.bf16.msra.mxu0 %v1297
        %1562 = vmatprep.subr.bf16.mxu0 %v1296
        %1563 = vmatpush1.bf16.msra.mxu0 %v1295
        %1564 = vmatprep.subr.bf16.mxu0 %v1294
        %1565 = vmatpush1.bf16.msra.mxu0 %v1293
        %1566 = vmatprep.subr.bf16.mxu0 0
        %1567 = vmatpush2.bf16.msra.mxu0 0
        %1568 = vmatprep.subr.bf16.mxu0 0
        %1569 = vmatpush2.bf16.msra.mxu0 0
        %1570 = vmatprep.subr.bf16.mxu0 0
        %1571 = vmatpush2.bf16.msra.mxu0 0
        %1572 = vmatprep.subr.bf16.mxu0 0
        %1573 = vmatpush2.bf16.msra.mxu0 0
        %1574 = vmatprep.subr.bf16.mxu0 0
        %1575 = vmatpush2.bf16.msra.mxu0 0
        %1576 = vmatprep.subr.bf16.mxu0 0
        %1577 = vmatpush2.bf16.msra.mxu0 0
        %1578 = vmatprep.subr.bf16.mxu0 0
        %1579 = vmatpush2.bf16.msra.mxu0 0
        %1580 = vmatprep.subr.bf16.mxu0 0
        %1581 = vmatpush2.bf16.msra.mxu0 0
        %1582 = vmatprep.mubr.bf16.mxu0 0
        %1583 = vmatmul.mubr.bf16.gmra.mxu0 %v736
        %v1584 = vpop.f32.mrf.mxu0
        %v1585 = vadd.f32 %v1542, %v1584
        %v1586 = vpop.f32.mrf.mxu0
        %v1587 = vadd.f32 %v1544, %v1586
        %v1588 = vpop.f32.mrf.mxu0
        %v1589 = vadd.f32 %v1546, %v1588
        %v1590 = vpop.f32.mrf.mxu0
        %v1591 = vadd.f32 %v1548, %v1590
        %1592 = vdwg.mxu0
        %v1593 = vmul.f32 %v1585, %v1585
        %v1594 = vmul.f32 %v1587, %v1587
        %v1595 = vmul.f32 %v1589, %v1589
        %v1596 = vmul.f32 %v1591, %v1591
        %v1597 = vadd.f32 %v1593, %v1594
        %1598 = vadd.xlane.f32.xlu0 %v1597
        %v1599 = vpop.xlane.xlu0 %1598
        %v1600 = vadd.f32 %v1595, %v1596
        %1601 = vadd.xlane.f32.xlu0 %v1600
        %v1602 = vpop.xlane.xlu0 %1601
        %v1603 = vmax.f32 %v1599, 1e-24
        %v1604 = vmax.f32 %v1602, 1e-24
        %v1605 = vrsqrt.pop %v1603
        %v1606 = vrsqrt.pop %v1604
        %v1607 = vmul.f32 %v1585, %v1605
        %v1608 = vmul.f32 %v1587, %v1605
        %v1609 = vmul.f32 %v1589, %v1606
        %v1610 = vmul.f32 %v1591, %v1606
        %1611 = vst [vmem:[%s300] sm:$0xff] %v1607
        %1612 = vst [vmem:[%s300 + $0x8] sm:$0xff] %v1608
        %1613 = vst [vmem:[%s300 + $0x10] sm:$0xff] %v1609
        %1614 = vst [vmem:[%s300 + $0x18] sm:$0xff] %v1610
        %v1615 = vpack.c.bf16 %v1609, %v1607
        %v1616 = vpack.c.bf16 %v1610, %v1608
        %v1617 = vld [vmem:[%s5] sm:$0xf]
        %v1618 = vld [vmem:[%s5 + $0x4] sm:$0xf]
        %v1619 = vld [vmem:[%s5 + $0x8] sm:$0xf]
        %v1620 = vld [vmem:[%s5 + $0xc] sm:$0xf]
        %v1621 = vld [vmem:[%s5 + $0x10] sm:$0xf]
        %v1622 = vld [vmem:[%s5 + $0x14] sm:$0xf]
        %v1623 = vld [vmem:[%s5 + $0x18] sm:$0xf]
        %v1624 = vld [vmem:[%s5 + $0x1c] sm:$0xf]
        %v1625 = vld [vmem:[%s5 + $0x20] sm:$0xf]
        %v1626 = vld [vmem:[%s5 + $0x24] sm:$0xf]
        %v1627 = vld [vmem:[%s5 + $0x28] sm:$0xf]
        %v1628 = vld [vmem:[%s5 + $0x2c] sm:$0xf]
        %v1629 = vld [vmem:[%s5 + $0x30] sm:$0xf]
        %v1630 = vld [vmem:[%s5 + $0x34] sm:$0xf]
        %v1631 = vld [vmem:[%s5 + $0x38] sm:$0xf]
        %v1632 = vld [vmem:[%s5 + $0x3c] sm:$0xf]
        %v1633 = vld [vmem:[%s5 + $0x40] sm:$0xf]
        %v1634 = vld [vmem:[%s5 + $0x44] sm:$0xf]
        %v1635 = vld [vmem:[%s5 + $0x48] sm:$0xf]
        %v1636 = vld [vmem:[%s5 + $0x4c] sm:$0xf]
        %v1637 = vld [vmem:[%s5 + $0x50] sm:$0xf]
        %v1638 = vld [vmem:[%s5 + $0x54] sm:$0xf]
        %v1639 = vld [vmem:[%s5 + $0x58] sm:$0xf]
        %v1640 = vld [vmem:[%s5 + $0x5c] sm:$0xf]
        %v1641 = vld [vmem:[%s5 + $0x60] sm:$0xf]
        %v1642 = vld [vmem:[%s5 + $0x64] sm:$0xf]
        %v1643 = vld [vmem:[%s5 + $0x68] sm:$0xf]
        %v1644 = vld [vmem:[%s5 + $0x6c] sm:$0xf]
        %v1645 = vld [vmem:[%s5 + $0x70] sm:$0xf]
        %v1646 = vld [vmem:[%s5 + $0x74] sm:$0xf]
        %v1647 = vld [vmem:[%s5 + $0x78] sm:$0xf]
        %v1648 = vld [vmem:[%s5 + $0x7c] sm:$0xf]
        %v1649 = vld [vmem:[%s6] sm:$0x1]
        %v1651 = vlaneseq
        %v1652 = vshrl.u32 %v1651, 7
        %v1653 = vsub.s32 0, %v1652
        %v1654 = vrot.slane %v1649, %v1653
        %v1688 = vunpack.c.l.b16 %v1617
        %v1689 = vunpack.c.l.b16 %v1618
        %v1690 = vunpack.c.l.b16 %v1619
        %v1691 = vunpack.c.l.b16 %v1620
        %v1692 = vunpack.c.l.b16 %v1621
        %v1693 = vunpack.c.l.b16 %v1622
        %v1694 = vunpack.c.l.b16 %v1623
        %v1695 = vunpack.c.l.b16 %v1624
        %v1696 = vunpack.c.l.b16 %v1625
        %v1697 = vunpack.c.l.b16 %v1626
        %v1698 = vunpack.c.l.b16 %v1627
        %v1699 = vunpack.c.l.b16 %v1628
        %v1700 = vunpack.c.l.b16 %v1629
        %v1701 = vunpack.c.l.b16 %v1630
        %v1702 = vunpack.c.l.b16 %v1631
        %v1703 = vunpack.c.l.b16 %v1632
        %v1704 = vunpack.c.l.b16 %v1633
        %v1705 = vunpack.c.l.b16 %v1634
        %v1706 = vunpack.c.l.b16 %v1635
        %v1707 = vunpack.c.l.b16 %v1636
        %v1708 = vunpack.c.l.b16 %v1637
        %v1709 = vunpack.c.l.b16 %v1638
        %v1710 = vunpack.c.l.b16 %v1639
        %v1711 = vunpack.c.l.b16 %v1640
        %v1712 = vunpack.c.l.b16 %v1641
        %v1713 = vunpack.c.l.b16 %v1642
        %v1714 = vunpack.c.l.b16 %v1643
        %v1715 = vunpack.c.l.b16 %v1644
        %v1716 = vunpack.c.l.b16 %v1645
        %v1717 = vunpack.c.l.b16 %v1646
        %v1718 = vunpack.c.l.b16 %v1647
        %v1719 = vunpack.c.l.b16 %v1648
        %v1720 = vpack.c.b16 %v1689, %v1688
        %v1721 = vpack.c.b16 %v1691, %v1690
        %v1722 = vpack.c.b16 %v1693, %v1692
        %v1723 = vpack.c.b16 %v1695, %v1694
        %v1724 = vpack.c.b16 %v1697, %v1696
        %v1725 = vpack.c.b16 %v1699, %v1698
        %v1726 = vpack.c.b16 %v1701, %v1700
        %v1727 = vpack.c.b16 %v1703, %v1702
        %v1728 = vpack.c.b16 %v1705, %v1704
        %v1729 = vpack.c.b16 %v1707, %v1706
        %v1730 = vpack.c.b16 %v1709, %v1708
        %v1731 = vpack.c.b16 %v1711, %v1710
        %v1732 = vpack.c.b16 %v1713, %v1712
        %v1733 = vpack.c.b16 %v1715, %v1714
        %v1734 = vpack.c.b16 %v1717, %v1716
        %v1735 = vpack.c.b16 %v1719, %v1718
        %1752 = vmatprep.subr.bf16.mxu0 0
        %1753 = vmatpush1.bf16.msra.mxu0 %v1727
        %1754 = vmatprep.subr.bf16.mxu0 0
        %1755 = vmatpush1.bf16.msra.mxu0 %v1726
        %1756 = vmatprep.subr.bf16.mxu0 0
        %1757 = vmatpush1.bf16.msra.mxu0 %v1725
        %1758 = vmatprep.subr.bf16.mxu0 0
        %1759 = vmatpush1.bf16.msra.mxu0 %v1724
        %1760 = vmatprep.subr.bf16.mxu0 0
        %1761 = vmatpush1.bf16.msra.mxu0 %v1723
        %1762 = vmatprep.subr.bf16.mxu0 0
        %1763 = vmatpush1.bf16.msra.mxu0 %v1722
        %1764 = vmatprep.subr.bf16.mxu0 0
        %1765 = vmatpush1.bf16.msra.mxu0 %v1721
        %1766 = vmatprep.subr.bf16.mxu0 0
        %1767 = vmatpush1.bf16.msra.mxu0 %v1720
        %1768 = vmatprep.subr.bf16.mxu0 0
        %1769 = vmatpush2.bf16.msra.mxu0 %v1735
        %1770 = vmatprep.subr.bf16.mxu0 0
        %1771 = vmatpush2.bf16.msra.mxu0 %v1734
        %1772 = vmatprep.subr.bf16.mxu0 0
        %1773 = vmatpush2.bf16.msra.mxu0 %v1733
        %1774 = vmatprep.subr.bf16.mxu0 0
        %1775 = vmatpush2.bf16.msra.mxu0 %v1732
        %1776 = vmatprep.subr.bf16.mxu0 0
        %1777 = vmatpush2.bf16.msra.mxu0 %v1731
        %1778 = vmatprep.subr.bf16.mxu0 0
        %1779 = vmatpush2.bf16.msra.mxu0 %v1730
        %1780 = vmatprep.subr.bf16.mxu0 0
        %1781 = vmatpush2.bf16.msra.mxu0 %v1729
        %1782 = vmatprep.subr.bf16.mxu0 0
        %1783 = vmatpush2.bf16.msra.mxu0 %v1728
        %1784 = vmatprep.mubr.bf16.mxu0 %v1616
        %1785 = vmatmul.mubr.bf16.gmra.mxu0 %v1615
        %v1786 = vpop.f32.mrf.mxu0
        %v1787 = vadd.f32 %v1654, %v1786
        %v1788 = vpop.f32.mrf.mxu0
        %v1789 = vpop.f32.mrf.mxu0
        %v1790 = vadd.f32 %v1654, %v1789
        %v1791 = vpop.f32.mrf.mxu0
        %1792 = vdwg.mxu0
        %v1793 = vand.u32 2147483647, %v1787
        %v1794 = vand.u32 2147483647, %v1790
        %v1795 = vsub.f32 0.0, %v1793
        %v1796 = vsub.f32 0.0, %v1794
        %v1797 = vmul.f32 %v1795, 1.442695
        %v1798 = vpow.pop %v1797
        %v1799 = vmul.f32 %v1796, 1.442695
        %v1800 = vpow.pop %v1799
        %v1801 = vadd.f32 %v1798, 1.0
        %v1802 = vadd.f32 %v1800, 1.0
        %v1803 = vrcp.pop %v1801
        %v1804 = vrcp.pop %v1802
        %vm1805 = vcmp.ge.f32.partialorder %v1787, 0.0
        %vm1806 = vcmp.ge.f32.partialorder %v1790, 0.0
        %v1807 = vmul.f32 %v1798, %v1803
        %v1808 = vmul.f32 %v1800, %v1804
        %v1809 = vsel %vm1805, %v1803, %v1807
        %v1810 = vsel %vm1806, %v1804, %v1808
        %v1811 = vlog2.pop %v1801
        %v1812 = vmul.f32 %v1811, 0.6931472
        %v1813 = vlog2.pop %v1802
        %v1814 = vmul.f32 %v1813, 0.6931472
        %v1815 = vmax.f32 %v1787, 0.0
        %v1816 = vmax.f32 %v1790, 0.0
        %v1817 = vadd.f32 %v1812, %v1815
        %v1818 = vadd.f32 %v1814, %v1816
        %v1819 = vlaneseq
        %v1820 = vand.u32 %v1819, 127
        %vm1821 = vcmp.eq.s32.totalorder %v1820, 0
        %v1822 = vsel %vm1821, %v1809, %v1817
        %v1823 = vsel %vm1821, %v1810, %v1818
        %v1824 = vpack.c.bf16 %v1823, %v1822
        %v1826 = vunpack.c.l.b16 %v1824
        %v1827 = vunpack.c.h.b16 %v1824
        %v1828 = vpack.c.b16 %v1826, %v1826
        %v1829 = vpack.c.b16 %v1827, %v1827
        %1832 = vst [vmem:[%s319] sm:$0xf] %v1828
        %1833 = vst [vmem:[%s319 + $0x4] sm:$0xf] %v1829
        %s1834 = sand.u32 %s183, 1
        %s1835 = scalar_lea.sflag [#allocation3], %s1834
        %s1836 = sand.u32 %s183, 1
        %s1837 = smul.addr %s1836, 32
        %s1838 = scalar_lea.vmem [#allocation2], %s1837
        %s1839 = smul.u32 2, %s23
        %p1840 = scmp.lt.s32.totalorder %s1839, 3
        %s1841 = scalar_select %p1840, %s1839, 3
        %s1842 = smul.addr %s1841, 4
        %s1843 = scalar_lea.vmem %s8, %s1842
        // Predicated region
        $region49: #{gnn_forward.1} parent=47 // pred_check
          %p1844 = pneg %p193
        $region50: #{gnn_forward.1} parent=47 // pred_check_branch
          %1846 = sbr.rel (%p1844) target = $region52
        $region51: #{gnn_forward.1} parent=47 // pred_region
          %s1847 = smul.u32 2, %s23
          %s1849 = ssub.s32 512, 512
          %1850 = vsyncadd %s1835, %s1849
          %s1851 = smul.addr %s1847, 2
          %s1852 = smul.addr %s1851, 128
          %s1853 = scalar_lea.hbm %s7, %s1852
          %s1854 = sshll.u32 %s1838, 4
          %s1855 = int_to_ptr.vmem [resolvable:$true] %s1854
          %1860 = dma.vmem_to_hbm [thread:$0]  %s1855, 512, %s1853, %s1835, 256, 256, 16
        $region52: #{gnn_forward.1} parent=47 // pred_fallthru
          _
        // Predicated region
        $region53: #{gnn_forward.1} parent=47 // pred_check
          %p1861 = pneg %p219
        $region54: #{gnn_forward.1} parent=47 // pred_check_branch
          %1863 = sbr.rel (%p1861) target = $region56
        $region55: #{gnn_forward.1} parent=47 // pred_region
          %s1864 = smul.u32 2, %s23
        $region56: #{gnn_forward.1} parent=47 // pred_fallthru
          _
      $region48: #{gnn_forward.1} parent=5 // pred_fallthru
        _
      %p1865 = scmp.le.s32.totalorder 2, %s18
      // Predicated region
      $region57: #{gnn_forward.1} parent=5 // pred_check
        %p1866 = pneg %p1865
      $region58: #{gnn_forward.1} parent=5 // pred_check_branch
        %1868 = sbr.rel (%p1866) target = $region60
      $region59: #{gnn_forward.1} parent=5 // pred_region
        %s1869 = ssub.s32 %s18, 2
        // Predicated region
        $region61: #{gnn_forward.1} parent=59 // pred_check
          %p1870 = pneg %p199
        $region62: #{gnn_forward.1} parent=59 // pred_check_branch
          %1872 = sbr.rel (%p1870) target = $region64
        $region63: #{gnn_forward.1} parent=59 // pred_region
          %s1873 = sand.u32 %s184, 1
          %s1874 = scalar_lea.sflag [#allocation3], %s1873
          %s1875 = sand.u32 %s184, 1
          %s1876 = smul.addr %s1875, 32
          %s1877 = scalar_lea.vmem [#allocation2], %s1876
          %1878 = dma.done %s1874, 512
        $region64: #{gnn_forward.1} parent=59 // pred_fallthru
          _
        // Predicated region
        $region65: #{gnn_forward.1} parent=59 // pred_check
          %p1879 = pneg %p225
        $region66: #{gnn_forward.1} parent=59 // pred_check_branch
          %1881 = sbr.rel (%p1879) target = $region68
        $region67: #{gnn_forward.1} parent=59 // pred_region
          %s1882 = smul.u32 2, %s24
          %p1883 = scmp.lt.s32.totalorder %s1882, 3
          %s1884 = scalar_select %p1883, %s1882, 3
          %s1885 = smul.addr %s1884, 4
          %s1886 = scalar_lea.vmem %s8, %s1885
        $region68: #{gnn_forward.1} parent=59 // pred_fallthru
          _
      $region60: #{gnn_forward.1} parent=5 // pred_fallthru
        _
    $region6: #{gnn_forward.1} parent=1 // loop_footer
      %s22 = sadd.s32 1, %s18
    $region7: #{gnn_forward.1} parent=1 // loop_footer_branch
      %17 = sbr.rel target = $region3
    $region8: #{gnn_forward.1} parent=1 // loop_exit
      _
    %1887 = vsyncpa [#allocation3], 1
    %s1888 = scalar_lea.sflag [#allocation3], 1
    %1889 = vsyncpa %s1888, 1

</llo_original>
